<compile_context>
chip_gen: v5e
topology: v5e:2x2
jax: 0.10.0
libtpu: 0.0.40
codegen_flags: <defaults>
</compile_context>

<pallas_src>
import functools

import jax
import jax.numpy as jnp
from jax.experimental import pallas as pl
from jax.experimental.pallas import tpu as pltpu


def _round_up(n, mult):
    return ((n + mult - 1) // mult) * mult


def _largest_divisor_leq(n, cap):
    cap = max(1, min(n, cap))
    for d in range(cap, 0, -1):
        if n % d == 0:
            return d
    return 1


def _ep_gru_kernel(gx_ref, m_ref, whr_ref, whn_ref, h0_ref, seq_ref, h_scr,
                   *, hp, chunk_t, compute_dtype):
    """One (batch_block, time_chunk) grid step of the episodic GRU recurrence.

    gx_ref : (Tc, Bb, 2*Hp) f32  precomputed x@Wx + b  ([r-half | n-half])
    m_ref  : (Tc, Bb, 1)    f32  per-step episodic gate
    whr/whn: (Hp, Hp)            recurrent weights (compute_dtype)
    h0_ref : (Bb, Hp)       f32  initial hidden state
    seq_ref: (Tc, Bb, Hp)        per-step hidden states (output)
    h_scr  : (Bb, Hp)       f32  hidden state carried across time chunks
    """
    ti = pl.program_id(1)

    @pl.when(ti == 0)
    def _():
        h_scr[...] = h0_ref[...].astype(jnp.float32)

    def step(i, h):
        gx_t = gx_ref[i].astype(jnp.float32)              # (Bb, 2Hp)
        m_t = m_ref[i].astype(jnp.float32)                # (Bb, 1)

        # Reset gate (recurrent matmul on MXU, f32 accumulation).
        gh_r = jnp.dot(h.astype(compute_dtype), whr_ref[...],
                       preferred_element_type=jnp.float32)
        r = jax.nn.sigmoid(gx_t[:, :hp] + gh_r)

        # Candidate.
        gh_n = jnp.dot((r * h).astype(compute_dtype), whn_ref[...],
                       preferred_element_type=jnp.float32)
        n = jnp.tanh(gx_t[:, hp:] + gh_n)

        # Episodic update: external gate m_t replaces the GRU update gate.
        h_new = m_t * n + (1.0 - m_t) * h

        seq_ref[i] = h_new.astype(seq_ref.dtype)
        return h_new

    h_final = jax.lax.fori_loop(0, chunk_t, step, h_scr[...], unroll=True)
    h_scr[...] = h_final


def ep_gru_scan_pallas(gx, m, h0, wh_r, wh_n, *, out_dtype,
                       max_chunk_t=32, batch_block=None,
                       compute_dtype=jnp.bfloat16):
    """Sequential time loop of the EpGRU cell on TPU (run / padded layout).

    gx : (T, Bp, 2*Hp) f32, m : (T, Bp, 1) f32, h0 : (Bp, Hp) f32,
    wh_r/wh_n : (Hp, Hp) compute_dtype.  Returns seq (T, Bp, Hp) in run order.
    """
    T, Bp, two_hp = gx.shape
    Hp = two_hp // 2

    Tc = _largest_divisor_leq(T, max_chunk_t)
    if batch_block is None:
        Bb = Bp
    else:
        Bb = _largest_divisor_leq(Bp, max(8, batch_block))
        if Bb % 8 != 0:
            Bb = Bp
    n_b = Bp // Bb
    n_t = T // Tc

    kernel = functools.partial(_ep_gru_kernel, hp=Hp, chunk_t=Tc,
                               compute_dtype=compute_dtype)

    seq = pl.pallas_call(
        kernel,
        out_shape=jax.ShapeDtypeStruct((T, Bp, Hp), out_dtype),
        grid_spec=pltpu.PrefetchScalarGridSpec(
            num_scalar_prefetch=0,
            grid=(n_b, n_t),
            in_specs=[
                pl.BlockSpec((Tc, Bb, 2 * Hp), lambda bi, ti: (ti, bi, 0)),  # gx
                pl.BlockSpec((Tc, Bb, 1), lambda bi, ti: (ti, bi, 0)),       # m
                pl.BlockSpec((Hp, Hp), lambda bi, ti: (0, 0)),               # Wh_r
                pl.BlockSpec((Hp, Hp), lambda bi, ti: (0, 0)),               # Wh_n
                pl.BlockSpec((Bb, Hp), lambda bi, ti: (bi, 0)),              # h0
            ],
            out_specs=pl.BlockSpec((Tc, Bb, Hp), lambda bi, ti: (ti, bi, 0)),
            scratch_shapes=[pltpu.VMEM((Bb, Hp), jnp.float32)],
        ),
        compiler_params=pltpu.CompilerParams(
            # Batch blocks are independent (v7x: shard across the 2 TCs);
            # time chunks carry the recurrence -> strictly sequential.
            dimension_semantics=("parallel", "arbitrary"),
        ),
    )(gx, m, wh_r, wh_n, h0)
    return seq


def ep_gru_layer(x, m, state_t0, params, *, direction="forward",
                 batch_first=False, compute_dtype=jnp.bfloat16,
                 max_chunk_t=32, batch_block=None):
    """Mirror of EpGRU_Layer.forward.

    x: (T, B, D) if not batch_first[0], else (B, T, D)
    m: (T, B, 1)  (time-major per-step gate)
    state_t0: (B, H) or None -> zeros (get_init_state)
    params: (Wx (D, 2H), Wh (H, 2H), b (2H,))
    """
    if isinstance(batch_first, bool):
        batch_first = (batch_first, batch_first)
    wx, wh, b = params

    if batch_first[0]:
        x = jnp.transpose(x, (1, 0, 2))
    T, B, D = x.shape
    H = wh.shape[0]
    if state_t0 is None:
        state_t0 = jnp.zeros((B, H), dtype=x.dtype)

    # reorder_inputs (backward direction reverses time).
    if direction == "backward":
        x_run, m_run = x[::-1], m[::-1]
    else:
        x_run, m_run = x, m

    # --- Lane-dense padding: hidden -> multiple of 128, batch -> multiple of 8.
    Hp = _round_up(H, 128)
    Bp = _round_up(B, 8)

    f32 = jnp.float32
    wx_r = jnp.zeros((D, Hp), f32).at[:, :H].set(wx[:, :H].astype(f32))
    wx_n = jnp.zeros((D, Hp), f32).at[:, :H].set(wx[:, H:].astype(f32))
    b_r = jnp.zeros((Hp,), f32).at[:H].set(b[:H].astype(f32))
    b_n = jnp.zeros((Hp,), f32).at[:H].set(b[H:].astype(f32))
    wh_r = jnp.zeros((Hp, Hp), f32).at[:H, :H].set(wh[:, :H].astype(f32))
    wh_n = jnp.zeros((Hp, Hp), f32).at[:H, :H].set(wh[:, H:].astype(f32))
    wh_r = wh_r.astype(compute_dtype)
    wh_n = wh_n.astype(compute_dtype)

    # --- Hoisted, time-independent input projection: one big MXU matmul. ---
    xf = x_run.reshape(T * B, D).astype(f32)
    gx = jnp.concatenate([xf @ wx_r + b_r[None, :], xf @ wx_n + b_n[None, :]],
                         axis=-1).reshape(T, B, 2 * Hp)

    m_f = m_run.astype(f32)
    h0 = jnp.zeros((Bp, Hp), f32).at[:B, :H].set(state_t0.astype(f32))
    if Bp != B:
        gx = jnp.concatenate([gx, jnp.zeros((T, Bp - B, 2 * Hp), f32)], axis=1)
        m_f = jnp.concatenate([m_f, jnp.zeros((T, Bp - B, 1), f32)], axis=1)

    seq_run = ep_gru_scan_pallas(
        gx, m_f, h0, wh_r, wh_n, out_dtype=x.dtype,
        max_chunk_t=max_chunk_t, batch_block=batch_block,
        compute_dtype=compute_dtype)

    # Final state = hidden after the last *processed* step (run order).
    state = seq_run[T - 1, :B, :H]
    seq = seq_run[:, :B, :H]
    if direction == "backward":
        seq = seq[::-1]
    if batch_first[1]:
        seq = jnp.transpose(seq, (1, 0, 2))
    return seq, state


def _reference(x, m, h0, wx, wh, b, compute_dtype=jnp.bfloat16):
    """Pure-JAX lax.scan reference, mirroring the kernel's matmul precision."""
    H = h0.shape[-1]
    wh_r = wh[:, :H].astype(compute_dtype)
    wh_n = wh[:, H:].astype(compute_dtype)

    def step(h, inp):
        xt, mt = inp
        gx = xt @ wx + b
        gh_r = jnp.dot(h.astype(compute_dtype), wh_r,
                       preferred_element_type=jnp.float32)
        r = jax.nn.sigmoid(gx[:, :H] + gh_r)
        gh_n = jnp.dot((r * h).astype(compute_dtype), wh_n,
                       preferred_element_type=jnp.float32)
        n = jnp.tanh(gx[:, H:] + gh_n)
        h_new = mt * n + (1.0 - mt) * h
        return h_new, h_new

    hT, seq = jax.lax.scan(step, h0, (x, m))
    return seq, hT


if __name__ == "__main__":
    key = jax.random.PRNGKey(0)
    T_len, B, D_in, H = 8, 8, 16, 32

    k1, k2, k3, k4, k5 = jax.random.split(key, 5)
    x = jax.random.normal(k1, (T_len, B, D_in), dtype=jnp.float32)
    m = jax.nn.sigmoid(jax.random.normal(k2, (T_len, B, 1), dtype=jnp.float32))

    # Deterministic parameter init (shapes implied by the EpGRU cell).
    scale_x = 1.0 / jnp.sqrt(jnp.float32(D_in))
    scale_h = 1.0 / jnp.sqrt(jnp.float32(H))
    wx = jax.random.normal(k3, (D_in, 2 * H), dtype=jnp.float32) * scale_x
    wh = jax.random.normal(k4, (H, 2 * H), dtype=jnp.float32) * scale_h
    b = jax.random.normal(k5, (2 * H,), dtype=jnp.float32) * 0.1
    params = (wx, wh, b)

    # state_t0 = None -> cell.get_init_state => zeros
    seq, state = ep_gru_layer(x, m, None, params,
                              direction="forward", batch_first=False)
    seq = jax.block_until_ready(seq)
    state = jax.block_until_ready(state)

    h0 = jnp.zeros((B, H), dtype=jnp.float32)
    ref_seq, ref_state = _reference(x, m, h0, wx, wh, b)
    assert seq.shape == (T_len, B, H) and state.shape == (B, H)
    assert jnp.allclose(seq, ref_seq, atol=2e-2, rtol=2e-2)
    assert jnp.allclose(state, ref_state, atol=2e-2, rtol=2e-2)

    # Backward direction path.
    seq_b, state_b = ep_gru_layer(x, m, None, params,
                                  direction="backward", batch_first=False)
    seq_b = jax.block_until_ready(seq_b)
    ref_seq_b, ref_state_b = _reference(x[::-1], m[::-1], h0, wx, wh, b)
    assert jnp.allclose(seq_b, ref_seq_b[::-1], atol=2e-2, rtol=2e-2)
    assert jnp.allclose(state_b, ref_state_b, atol=2e-2, rtol=2e-2)

    print("KERNEL_OK")
</pallas_src>

<mosaic_0001>
module attributes {stable_mosaic.version = 11 : i64} {
  func.func @_ep_gru_kernel(%arg0: i32, %arg1: i32, %arg2: memref<8x8x256xf32, #tpu.memory_space<vmem>>, %arg3: memref<8x8x1xf32, #tpu.memory_space<vmem>>, %arg4: memref<128x128xbf16, #tpu.memory_space<vmem>>, %arg5: memref<128x128xbf16, #tpu.memory_space<vmem>>, %arg6: memref<8x128xf32, #tpu.memory_space<vmem>>, %arg7: memref<8x8x128xf32, #tpu.memory_space<vmem>>, %arg8: memref<8x128xf32, #tpu.memory_space<vmem>>) attributes {dimension_semantics = [#tpu.dimension_semantics<parallel>, #tpu.dimension_semantics<arbitrary>], iteration_bounds = array<i64: 1, 1>, scalar_prefetch = 0 : i64, scratch_operands = 1 : i64, tpu.core_type = #tpu.core_type<tc>, window_params = [{transform_indices = @transform_0, window_bounds = array<i64: 8, 8, 256>}, {transform_indices = @transform_1, window_bounds = array<i64: 8, 8, 1>}, {pipeline_mode = #tpu.pipeline_mode<synchronous>, transform_indices = @transform_2, window_bounds = array<i64: 128, 128>}, {pipeline_mode = #tpu.pipeline_mode<synchronous>, transform_indices = @transform_3, window_bounds = array<i64: 128, 128>}, {transform_indices = @transform_4, window_bounds = array<i64: 8, 128>}, {transform_indices = @transform_5, window_bounds = array<i64: 8, 8, 128>}]} {
    %c0_i32 = arith.constant 0 : i32
    %0 = arith.cmpi eq, %arg1, %c0_i32 : i32
    %1 = arith.extui %0 : i1 to i32
    %c0_i32_0 = arith.constant 0 : i32
    %2 = arith.cmpi ne, %1, %c0_i32_0 : i32
    scf.if %2 {
      %c0_116 = arith.constant 0 : index
      %c0_117 = arith.constant 0 : index
      %277 = vector.load %arg6[%c0_116, %c0_117] : memref<8x128xf32, #tpu.memory_space<vmem>>, vector<8x128xf32>
      %c0_118 = arith.constant 0 : index
      %c0_119 = arith.constant 0 : index
      %278 = vector.load %arg8[%c0_118, %c0_119] : memref<8x128xf32, #tpu.memory_space<vmem>>, vector<8x128xf32>
      tpu.vector_store %arg8[%c0_118, %c0_119], %277 {strides = array<i32>} : memref<8x128xf32, #tpu.memory_space<vmem>>, vector<8x128xf32>,
    } else {
    }
    %c0 = arith.constant 0 : index
    %c0_1 = arith.constant 0 : index
    %3 = vector.load %arg8[%c0, %c0_1] : memref<8x128xf32, #tpu.memory_space<vmem>>, vector<8x128xf32>
    %c0_i32_2 = arith.constant 0 : i32
    %4 = arith.index_cast %c0_i32_2 : i32 to index
    %c0_3 = arith.constant 0 : index
    %c0_4 = arith.constant 0 : index
    %5 = vector.load %arg2[%4, %c0_3, %c0_4] : memref<8x8x256xf32, #tpu.memory_space<vmem>>, vector<1x8x256xf32>
    %6 = vector.shape_cast %5 : vector<1x8x256xf32> to vector<8x256xf32>
    %7 = arith.index_cast %c0_i32_2 : i32 to index
    %c0_5 = arith.constant 0 : index
    %c0_6 = arith.constant 0 : index
    %8 = vector.load %arg3[%7, %c0_5, %c0_6] : memref<8x8x1xf32, #tpu.memory_space<vmem>>, vector<1x8x1xf32>
    %9 = vector.shape_cast %8 : vector<1x8x1xf32> to vector<8x1xf32>
    %10 = arith.truncf %3 : vector<8x128xf32> to vector<8x128xbf16>
    %c0_7 = arith.constant 0 : index
    %c0_8 = arith.constant 0 : index
    %11 = vector.load %arg4[%c0_7, %c0_8] : memref<128x128xbf16, #tpu.memory_space<vmem>>, vector<128x128xbf16>
    %cst = arith.constant dense<0.000000e+00> : vector<8x128xf32>
    %12 = tpu.matmul %10, %11, %cst {dimension_numbers = #tpu.dot_dimension_numbers<[1], [0], [0], [1], [0, 0, 1, 1], [], []>} : vector<8x128xbf16>, vector<128x128xbf16>, vector<8x128xf32> -> vector<8x128xf32>
    %13 = vector.extract_strided_slice %6 {offsets = [0, 0], sizes = [8, 128], strides = [1, 1]} : vector<8x256xf32> to vector<8x128xf32>
    %14 = arith.addf %13, %12 : vector<8x128xf32>
    %15 = arith.negf %14 : vector<8x128xf32>
    %16 = math.exp %15 : vector<8x128xf32>
    %cst_9 = arith.constant 1.000000e+00 : f32
    %17 = vector.broadcast %cst_9 : f32 to vector<8x128xf32>
    %18 = arith.addf %17, %16 : vector<8x128xf32>
    %19 = arith.divf %17, %18 : vector<8x128xf32>
    %20 = arith.mulf %19, %3 : vector<8x128xf32>
    %21 = arith.truncf %20 : vector<8x128xf32> to vector<8x128xbf16>
    %c0_10 = arith.constant 0 : index
    %c0_11 = arith.constant 0 : index
    %22 = vector.load %arg5[%c0_10, %c0_11] : memref<128x128xbf16, #tpu.memory_space<vmem>>, vector<128x128xbf16>
    %cst_12 = arith.constant dense<0.000000e+00> : vector<8x128xf32>
    %23 = tpu.matmul %21, %22, %cst_12 {dimension_numbers = #tpu.dot_dimension_numbers<[1], [0], [0], [1], [0, 0, 1, 1], [], []>} : vector<8x128xbf16>, vector<128x128xbf16>, vector<8x128xf32> -> vector<8x128xf32>
    %24 = vector.extract_strided_slice %6 {offsets = [0, 128], sizes = [8, 128], strides = [1, 1]} : vector<8x256xf32> to vector<8x128xf32>
    %25 = arith.addf %24, %23 : vector<8x128xf32>
    %26 = math.tanh %25 : vector<8x128xf32>
    %27 = vector.broadcast %9 : vector<8x1xf32> to vector<8x128xf32>
    %28 = arith.mulf %27, %26 : vector<8x128xf32>
    %cst_13 = arith.constant 1.000000e+00 : f32
    %29 = vector.broadcast %cst_13 : f32 to vector<8x1xf32>
    %30 = arith.subf %29, %9 : vector<8x1xf32>
    %31 = vector.broadcast %30 : vector<8x1xf32> to vector<8x128xf32>
    %32 = arith.mulf %31, %3 : vector<8x128xf32>
    %33 = arith.addf %28, %32 : vector<8x128xf32>
    %34 = arith.index_cast %c0_i32_2 : i32 to index
    %c0_14 = arith.constant 0 : index
    %c0_15 = arith.constant 0 : index
    %35 = vector.load %arg7[%34, %c0_14, %c0_15] : memref<8x8x128xf32, #tpu.memory_space<vmem>>, vector<1x8x128xf32>
    %36 = vector.shape_cast %35 : vector<1x8x128xf32> to vector<8x128xf32>
    %37 = vector.shape_cast %33 : vector<8x128xf32> to vector<1x8x128xf32>
    tpu.vector_store %arg7[%34, %c0_14, %c0_15], %37 {strides = array<i32>} : memref<8x8x128xf32, #tpu.memory_space<vmem>>, vector<1x8x128xf32>,
    %c1_i32 = arith.constant 1 : i32
    %38 = arith.index_cast %c1_i32 : i32 to index
    %c0_16 = arith.constant 0 : index
    %c0_17 = arith.constant 0 : index
    %39 = vector.load %arg2[%38, %c0_16, %c0_17] : memref<8x8x256xf32, #tpu.memory_space<vmem>>, vector<1x8x256xf32>
    %40 = vector.shape_cast %39 : vector<1x8x256xf32> to vector<8x256xf32>
    %41 = arith.index_cast %c1_i32 : i32 to index
    %c0_18 = arith.constant 0 : index
    %c0_19 = arith.constant 0 : index
    %42 = vector.load %arg3[%41, %c0_18, %c0_19] : memref<8x8x1xf32, #tpu.memory_space<vmem>>, vector<1x8x1xf32>
    %43 = vector.shape_cast %42 : vector<1x8x1xf32> to vector<8x1xf32>
    %44 = arith.truncf %33 : vector<8x128xf32> to vector<8x128xbf16>
    %c0_20 = arith.constant 0 : index
    %c0_21 = arith.constant 0 : index
    %45 = vector.load %arg4[%c0_20, %c0_21] : memref<128x128xbf16, #tpu.memory_space<vmem>>, vector<128x128xbf16>
    %cst_22 = arith.constant dense<0.000000e+00> : vector<8x128xf32>
    %46 = tpu.matmul %44, %45, %cst_22 {dimension_numbers = #tpu.dot_dimension_numbers<[1], [0], [0], [1], [0, 0, 1, 1], [], []>} : vector<8x128xbf16>, vector<128x128xbf16>, vector<8x128xf32> -> vector<8x128xf32>
    %47 = vector.extract_strided_slice %40 {offsets = [0, 0], sizes = [8, 128], strides = [1, 1]} : vector<8x256xf32> to vector<8x128xf32>
    %48 = arith.addf %47, %46 : vector<8x128xf32>
    %49 = arith.negf %48 : vector<8x128xf32>
    %50 = math.exp %49 : vector<8x128xf32>
    %cst_23 = arith.constant 1.000000e+00 : f32
    %51 = vector.broadcast %cst_23 : f32 to vector<8x128xf32>
    %52 = arith.addf %51, %50 : vector<8x128xf32>
    %53 = arith.divf %51, %52 : vector<8x128xf32>
    %54 = arith.mulf %53, %33 : vector<8x128xf32>
    %55 = arith.truncf %54 : vector<8x128xf32> to vector<8x128xbf16>
    %c0_24 = arith.constant 0 : index
    %c0_25 = arith.constant 0 : index
    %56 = vector.load %arg5[%c0_24, %c0_25] : memref<128x128xbf16, #tpu.memory_space<vmem>>, vector<128x128xbf16>
    %cst_26 = arith.constant dense<0.000000e+00> : vector<8x128xf32>
    %57 = tpu.matmul %55, %56, %cst_26 {dimension_numbers = #tpu.dot_dimension_numbers<[1], [0], [0], [1], [0, 0, 1, 1], [], []>} : vector<8x128xbf16>, vector<128x128xbf16>, vector<8x128xf32> -> vector<8x128xf32>
    %58 = vector.extract_strided_slice %40 {offsets = [0, 128], sizes = [8, 128], strides = [1, 1]} : vector<8x256xf32> to vector<8x128xf32>
    %59 = arith.addf %58, %57 : vector<8x128xf32>
    %60 = math.tanh %59 : vector<8x128xf32>
    %61 = vector.broadcast %43 : vector<8x1xf32> to vector<8x128xf32>
    %62 = arith.mulf %61, %60 : vector<8x128xf32>
    %cst_27 = arith.constant 1.000000e+00 : f32
    %63 = vector.broadcast %cst_27 : f32 to vector<8x1xf32>
    %64 = arith.subf %63, %43 : vector<8x1xf32>
    %65 = vector.broadcast %64 : vector<8x1xf32> to vector<8x128xf32>
    %66 = arith.mulf %65, %33 : vector<8x128xf32>
    %67 = arith.addf %62, %66 : vector<8x128xf32>
    %68 = arith.index_cast %c1_i32 : i32 to index
    %c0_28 = arith.constant 0 : index
    %c0_29 = arith.constant 0 : index
    %69 = vector.load %arg7[%68, %c0_28, %c0_29] : memref<8x8x128xf32, #tpu.memory_space<vmem>>, vector<1x8x128xf32>
    %70 = vector.shape_cast %69 : vector<1x8x128xf32> to vector<8x128xf32>
    %71 = vector.shape_cast %67 : vector<8x128xf32> to vector<1x8x128xf32>
    tpu.vector_store %arg7[%68, %c0_28, %c0_29], %71 {strides = array<i32>} : memref<8x8x128xf32, #tpu.memory_space<vmem>>, vector<1x8x128xf32>,
    %c2_i32 = arith.constant 2 : i32
    %72 = arith.index_cast %c2_i32 : i32 to index
    %c0_30 = arith.constant 0 : index
    %c0_31 = arith.constant 0 : index
    %73 = vector.load %arg2[%72, %c0_30, %c0_31] : memref<8x8x256xf32, #tpu.memory_space<vmem>>, vector<1x8x256xf32>
    %74 = vector.shape_cast %73 : vector<1x8x256xf32> to vector<8x256xf32>
    %75 = arith.index_cast %c2_i32 : i32 to index
    %c0_32 = arith.constant 0 : index
    %c0_33 = arith.constant 0 : index
    %76 = vector.load %arg3[%75, %c0_32, %c0_33] : memref<8x8x1xf32, #tpu.memory_space<vmem>>, vector<1x8x1xf32>
    %77 = vector.shape_cast %76 : vector<1x8x1xf32> to vector<8x1xf32>
    %78 = arith.truncf %67 : vector<8x128xf32> to vector<8x128xbf16>
    %c0_34 = arith.constant 0 : index
    %c0_35 = arith.constant 0 : index
    %79 = vector.load %arg4[%c0_34, %c0_35] : memref<128x128xbf16, #tpu.memory_space<vmem>>, vector<128x128xbf16>
    %cst_36 = arith.constant dense<0.000000e+00> : vector<8x128xf32>
    %80 = tpu.matmul %78, %79, %cst_36 {dimension_numbers = #tpu.dot_dimension_numbers<[1], [0], [0], [1], [0, 0, 1, 1], [], []>} : vector<8x128xbf16>, vector<128x128xbf16>, vector<8x128xf32> -> vector<8x128xf32>
    %81 = vector.extract_strided_slice %74 {offsets = [0, 0], sizes = [8, 128], strides = [1, 1]} : vector<8x256xf32> to vector<8x128xf32>
    %82 = arith.addf %81, %80 : vector<8x128xf32>
    %83 = arith.negf %82 : vector<8x128xf32>
    %84 = math.exp %83 : vector<8x128xf32>
    %cst_37 = arith.constant 1.000000e+00 : f32
    %85 = vector.broadcast %cst_37 : f32 to vector<8x128xf32>
    %86 = arith.addf %85, %84 : vector<8x128xf32>
    %87 = arith.divf %85, %86 : vector<8x128xf32>
    %88 = arith.mulf %87, %67 : vector<8x128xf32>
    %89 = arith.truncf %88 : vector<8x128xf32> to vector<8x128xbf16>
    %c0_38 = arith.constant 0 : index
    %c0_39 = arith.constant 0 : index
    %90 = vector.load %arg5[%c0_38, %c0_39] : memref<128x128xbf16, #tpu.memory_space<vmem>>, vector<128x128xbf16>
    %cst_40 = arith.constant dense<0.000000e+00> : vector<8x128xf32>
    %91 = tpu.matmul %89, %90, %cst_40 {dimension_numbers = #tpu.dot_dimension_numbers<[1], [0], [0], [1], [0, 0, 1, 1], [], []>} : vector<8x128xbf16>, vector<128x128xbf16>, vector<8x128xf32> -> vector<8x128xf32>
    %92 = vector.extract_strided_slice %74 {offsets = [0, 128], sizes = [8, 128], strides = [1, 1]} : vector<8x256xf32> to vector<8x128xf32>
    %93 = arith.addf %92, %91 : vector<8x128xf32>
    %94 = math.tanh %93 : vector<8x128xf32>
    %95 = vector.broadcast %77 : vector<8x1xf32> to vector<8x128xf32>
    %96 = arith.mulf %95, %94 : vector<8x128xf32>
    %cst_41 = arith.constant 1.000000e+00 : f32
    %97 = vector.broadcast %cst_41 : f32 to vector<8x1xf32>
    %98 = arith.subf %97, %77 : vector<8x1xf32>
    %99 = vector.broadcast %98 : vector<8x1xf32> to vector<8x128xf32>
    %100 = arith.mulf %99, %67 : vector<8x128xf32>
    %101 = arith.addf %96, %100 : vector<8x128xf32>
    %102 = arith.index_cast %c2_i32 : i32 to index
    %c0_42 = arith.constant 0 : index
    %c0_43 = arith.constant 0 : index
    %103 = vector.load %arg7[%102, %c0_42, %c0_43] : memref<8x8x128xf32, #tpu.memory_space<vmem>>, vector<1x8x128xf32>
    %104 = vector.shape_cast %103 : vector<1x8x128xf32> to vector<8x128xf32>
    %105 = vector.shape_cast %101 : vector<8x128xf32> to vector<1x8x128xf32>
    tpu.vector_store %arg7[%102, %c0_42, %c0_43], %105 {strides = array<i32>} : memref<8x8x128xf32, #tpu.memory_space<vmem>>, vector<1x8x128xf32>,
    %c3_i32 = arith.constant 3 : i32
    %106 = arith.index_cast %c3_i32 : i32 to index
    %c0_44 = arith.constant 0 : index
    %c0_45 = arith.constant 0 : index
    %107 = vector.load %arg2[%106, %c0_44, %c0_45] : memref<8x8x256xf32, #tpu.memory_space<vmem>>, vector<1x8x256xf32>
    %108 = vector.shape_cast %107 : vector<1x8x256xf32> to vector<8x256xf32>
    %109 = arith.index_cast %c3_i32 : i32 to index
    %c0_46 = arith.constant 0 : index
    %c0_47 = arith.constant 0 : index
    %110 = vector.load %arg3[%109, %c0_46, %c0_47] : memref<8x8x1xf32, #tpu.memory_space<vmem>>, vector<1x8x1xf32>
    %111 = vector.shape_cast %110 : vector<1x8x1xf32> to vector<8x1xf32>
    %112 = arith.truncf %101 : vector<8x128xf32> to vector<8x128xbf16>
    %c0_48 = arith.constant 0 : index
    %c0_49 = arith.constant 0 : index
    %113 = vector.load %arg4[%c0_48, %c0_49] : memref<128x128xbf16, #tpu.memory_space<vmem>>, vector<128x128xbf16>
    %cst_50 = arith.constant dense<0.000000e+00> : vector<8x128xf32>
    %114 = tpu.matmul %112, %113, %cst_50 {dimension_numbers = #tpu.dot_dimension_numbers<[1], [0], [0], [1], [0, 0, 1, 1], [], []>} : vector<8x128xbf16>, vector<128x128xbf16>, vector<8x128xf32> -> vector<8x128xf32>
    %115 = vector.extract_strided_slice %108 {offsets = [0, 0], sizes = [8, 128], strides = [1, 1]} : vector<8x256xf32> to vector<8x128xf32>
    %116 = arith.addf %115, %114 : vector<8x128xf32>
    %117 = arith.negf %116 : vector<8x128xf32>
    %118 = math.exp %117 : vector<8x128xf32>
    %cst_51 = arith.constant 1.000000e+00 : f32
    %119 = vector.broadcast %cst_51 : f32 to vector<8x128xf32>
    %120 = arith.addf %119, %118 : vector<8x128xf32>
    %121 = arith.divf %119, %120 : vector<8x128xf32>
    %122 = arith.mulf %121, %101 : vector<8x128xf32>
    %123 = arith.truncf %122 : vector<8x128xf32> to vector<8x128xbf16>
    %c0_52 = arith.constant 0 : index
    %c0_53 = arith.constant 0 : index
    %124 = vector.load %arg5[%c0_52, %c0_53] : memref<128x128xbf16, #tpu.memory_space<vmem>>, vector<128x128xbf16>
    %cst_54 = arith.constant dense<0.000000e+00> : vector<8x128xf32>
    %125 = tpu.matmul %123, %124, %cst_54 {dimension_numbers = #tpu.dot_dimension_numbers<[1], [0], [0], [1], [0, 0, 1, 1], [], []>} : vector<8x128xbf16>, vector<128x128xbf16>, vector<8x128xf32> -> vector<8x128xf32>
    %126 = vector.extract_strided_slice %108 {offsets = [0, 128], sizes = [8, 128], strides = [1, 1]} : vector<8x256xf32> to vector<8x128xf32>
    %127 = arith.addf %126, %125 : vector<8x128xf32>
    %128 = math.tanh %127 : vector<8x128xf32>
    %129 = vector.broadcast %111 : vector<8x1xf32> to vector<8x128xf32>
    %130 = arith.mulf %129, %128 : vector<8x128xf32>
    %cst_55 = arith.constant 1.000000e+00 : f32
    %131 = vector.broadcast %cst_55 : f32 to vector<8x1xf32>
    %132 = arith.subf %131, %111 : vector<8x1xf32>
    %133 = vector.broadcast %132 : vector<8x1xf32> to vector<8x128xf32>
    %134 = arith.mulf %133, %101 : vector<8x128xf32>
    %135 = arith.addf %130, %134 : vector<8x128xf32>
    %136 = arith.index_cast %c3_i32 : i32 to index
    %c0_56 = arith.constant 0 : index
    %c0_57 = arith.constant 0 : index
    %137 = vector.load %arg7[%136, %c0_56, %c0_57] : memref<8x8x128xf32, #tpu.memory_space<vmem>>, vector<1x8x128xf32>
    %138 = vector.shape_cast %137 : vector<1x8x128xf32> to vector<8x128xf32>
    %139 = vector.shape_cast %135 : vector<8x128xf32> to vector<1x8x128xf32>
    tpu.vector_store %arg7[%136, %c0_56, %c0_57], %139 {strides = array<i32>} : memref<8x8x128xf32, #tpu.memory_space<vmem>>, vector<1x8x128xf32>,
    %c4_i32 = arith.constant 4 : i32
    %140 = arith.index_cast %c4_i32 : i32 to index
    %c0_58 = arith.constant 0 : index
    %c0_59 = arith.constant 0 : index
    %141 = vector.load %arg2[%140, %c0_58, %c0_59] : memref<8x8x256xf32, #tpu.memory_space<vmem>>, vector<1x8x256xf32>
    %142 = vector.shape_cast %141 : vector<1x8x256xf32> to vector<8x256xf32>
    %143 = arith.index_cast %c4_i32 : i32 to index
    %c0_60 = arith.constant 0 : index
    %c0_61 = arith.constant 0 : index
    %144 = vector.load %arg3[%143, %c0_60, %c0_61] : memref<8x8x1xf32, #tpu.memory_space<vmem>>, vector<1x8x1xf32>
    %145 = vector.shape_cast %144 : vector<1x8x1xf32> to vector<8x1xf32>
    %146 = arith.truncf %135 : vector<8x128xf32> to vector<8x128xbf16>
    %c0_62 = arith.constant 0 : index
    %c0_63 = arith.constant 0 : index
    %147 = vector.load %arg4[%c0_62, %c0_63] : memref<128x128xbf16, #tpu.memory_space<vmem>>, vector<128x128xbf16>
    %cst_64 = arith.constant dense<0.000000e+00> : vector<8x128xf32>
    %148 = tpu.matmul %146, %147, %cst_64 {dimension_numbers = #tpu.dot_dimension_numbers<[1], [0], [0], [1], [0, 0, 1, 1], [], []>} : vector<8x128xbf16>, vector<128x128xbf16>, vector<8x128xf32> -> vector<8x128xf32>
    %149 = vector.extract_strided_slice %142 {offsets = [0, 0], sizes = [8, 128], strides = [1, 1]} : vector<8x256xf32> to vector<8x128xf32>
    %150 = arith.addf %149, %148 : vector<8x128xf32>
    %151 = arith.negf %150 : vector<8x128xf32>
    %152 = math.exp %151 : vector<8x128xf32>
    %cst_65 = arith.constant 1.000000e+00 : f32
    %153 = vector.broadcast %cst_65 : f32 to vector<8x128xf32>
    %154 = arith.addf %153, %152 : vector<8x128xf32>
    %155 = arith.divf %153, %154 : vector<8x128xf32>
    %156 = arith.mulf %155, %135 : vector<8x128xf32>
    %157 = arith.truncf %156 : vector<8x128xf32> to vector<8x128xbf16>
    %c0_66 = arith.constant 0 : index
    %c0_67 = arith.constant 0 : index
    %158 = vector.load %arg5[%c0_66, %c0_67] : memref<128x128xbf16, #tpu.memory_space<vmem>>, vector<128x128xbf16>
    %cst_68 = arith.constant dense<0.000000e+00> : vector<8x128xf32>
    %159 = tpu.matmul %157, %158, %cst_68 {dimension_numbers = #tpu.dot_dimension_numbers<[1], [0], [0], [1], [0, 0, 1, 1], [], []>} : vector<8x128xbf16>, vector<128x128xbf16>, vector<8x128xf32> -> vector<8x128xf32>
    %160 = vector.extract_strided_slice %142 {offsets = [0, 128], sizes = [8, 128], strides = [1, 1]} : vector<8x256xf32> to vector<8x128xf32>
    %161 = arith.addf %160, %159 : vector<8x128xf32>
    %162 = math.tanh %161 : vector<8x128xf32>
    %163 = vector.broadcast %145 : vector<8x1xf32> to vector<8x128xf32>
    %164 = arith.mulf %163, %162 : vector<8x128xf32>
    %cst_69 = arith.constant 1.000000e+00 : f32
    %165 = vector.broadcast %cst_69 : f32 to vector<8x1xf32>
    %166 = arith.subf %165, %145 : vector<8x1xf32>
    %167 = vector.broadcast %166 : vector<8x1xf32> to vector<8x128xf32>
    %168 = arith.mulf %167, %135 : vector<8x128xf32>
    %169 = arith.addf %164, %168 : vector<8x128xf32>
    %170 = arith.index_cast %c4_i32 : i32 to index
    %c0_70 = arith.constant 0 : index
    %c0_71 = arith.constant 0 : index
    %171 = vector.load %arg7[%170, %c0_70, %c0_71] : memref<8x8x128xf32, #tpu.memory_space<vmem>>, vector<1x8x128xf32>
    %172 = vector.shape_cast %171 : vector<1x8x128xf32> to vector<8x128xf32>
    %173 = vector.shape_cast %169 : vector<8x128xf32> to vector<1x8x128xf32>
    tpu.vector_store %arg7[%170, %c0_70, %c0_71], %173 {strides = array<i32>} : memref<8x8x128xf32, #tpu.memory_space<vmem>>, vector<1x8x128xf32>,
    %c5_i32 = arith.constant 5 : i32
    %174 = arith.index_cast %c5_i32 : i32 to index
    %c0_72 = arith.constant 0 : index
    %c0_73 = arith.constant 0 : index
    %175 = vector.load %arg2[%174, %c0_72, %c0_73] : memref<8x8x256xf32, #tpu.memory_space<vmem>>, vector<1x8x256xf32>
    %176 = vector.shape_cast %175 : vector<1x8x256xf32> to vector<8x256xf32>
    %177 = arith.index_cast %c5_i32 : i32 to index
    %c0_74 = arith.constant 0 : index
    %c0_75 = arith.constant 0 : index
    %178 = vector.load %arg3[%177, %c0_74, %c0_75] : memref<8x8x1xf32, #tpu.memory_space<vmem>>, vector<1x8x1xf32>
    %179 = vector.shape_cast %178 : vector<1x8x1xf32> to vector<8x1xf32>
    %180 = arith.truncf %169 : vector<8x128xf32> to vector<8x128xbf16>
    %c0_76 = arith.constant 0 : index
    %c0_77 = arith.constant 0 : index
    %181 = vector.load %arg4[%c0_76, %c0_77] : memref<128x128xbf16, #tpu.memory_space<vmem>>, vector<128x128xbf16>
    %cst_78 = arith.constant dense<0.000000e+00> : vector<8x128xf32>
    %182 = tpu.matmul %180, %181, %cst_78 {dimension_numbers = #tpu.dot_dimension_numbers<[1], [0], [0], [1], [0, 0, 1, 1], [], []>} : vector<8x128xbf16>, vector<128x128xbf16>, vector<8x128xf32> -> vector<8x128xf32>
    %183 = vector.extract_strided_slice %176 {offsets = [0, 0], sizes = [8, 128], strides = [1, 1]} : vector<8x256xf32> to vector<8x128xf32>
    %184 = arith.addf %183, %182 : vector<8x128xf32>
    %185 = arith.negf %184 : vector<8x128xf32>
    %186 = math.exp %185 : vector<8x128xf32>
    %cst_79 = arith.constant 1.000000e+00 : f32
    %187 = vector.broadcast %cst_79 : f32 to vector<8x128xf32>
    %188 = arith.addf %187, %186 : vector<8x128xf32>
    %189 = arith.divf %187, %188 : vector<8x128xf32>
    %190 = arith.mulf %189, %169 : vector<8x128xf32>
    %191 = arith.truncf %190 : vector<8x128xf32> to vector<8x128xbf16>
    %c0_80 = arith.constant 0 : index
    %c0_81 = arith.constant 0 : index
    %192 = vector.load %arg5[%c0_80, %c0_81] : memref<128x128xbf16, #tpu.memory_space<vmem>>, vector<128x128xbf16>
    %cst_82 = arith.constant dense<0.000000e+00> : vector<8x128xf32>
    %193 = tpu.matmul %191, %192, %cst_82 {dimension_numbers = #tpu.dot_dimension_numbers<[1], [0], [0], [1], [0, 0, 1, 1], [], []>} : vector<8x128xbf16>, vector<128x128xbf16>, vector<8x128xf32> -> vector<8x128xf32>
    %194 = vector.extract_strided_slice %176 {offsets = [0, 128], sizes = [8, 128], strides = [1, 1]} : vector<8x256xf32> to vector<8x128xf32>
    %195 = arith.addf %194, %193 : vector<8x128xf32>
    %196 = math.tanh %195 : vector<8x128xf32>
    %197 = vector.broadcast %179 : vector<8x1xf32> to vector<8x128xf32>
    %198 = arith.mulf %197, %196 : vector<8x128xf32>
    %cst_83 = arith.constant 1.000000e+00 : f32
    %199 = vector.broadcast %cst_83 : f32 to vector<8x1xf32>
    %200 = arith.subf %199, %179 : vector<8x1xf32>
    %201 = vector.broadcast %200 : vector<8x1xf32> to vector<8x128xf32>
    %202 = arith.mulf %201, %169 : vector<8x128xf32>
    %203 = arith.addf %198, %202 : vector<8x128xf32>
    %204 = arith.index_cast %c5_i32 : i32 to index
    %c0_84 = arith.constant 0 : index
    %c0_85 = arith.constant 0 : index
    %205 = vector.load %arg7[%204, %c0_84, %c0_85] : memref<8x8x128xf32, #tpu.memory_space<vmem>>, vector<1x8x128xf32>
    %206 = vector.shape_cast %205 : vector<1x8x128xf32> to vector<8x128xf32>
    %207 = vector.shape_cast %203 : vector<8x128xf32> to vector<1x8x128xf32>
    tpu.vector_store %arg7[%204, %c0_84, %c0_85], %207 {strides = array<i32>} : memref<8x8x128xf32, #tpu.memory_space<vmem>>, vector<1x8x128xf32>,
    %c6_i32 = arith.constant 6 : i32
    %208 = arith.index_cast %c6_i32 : i32 to index
    %c0_86 = arith.constant 0 : index
    %c0_87 = arith.constant 0 : index
    %209 = vector.load %arg2[%208, %c0_86, %c0_87] : memref<8x8x256xf32, #tpu.memory_space<vmem>>, vector<1x8x256xf32>
    %210 = vector.shape_cast %209 : vector<1x8x256xf32> to vector<8x256xf32>
    %211 = arith.index_cast %c6_i32 : i32 to index
    %c0_88 = arith.constant 0 : index
    %c0_89 = arith.constant 0 : index
    %212 = vector.load %arg3[%211, %c0_88, %c0_89] : memref<8x8x1xf32, #tpu.memory_space<vmem>>, vector<1x8x1xf32>
    %213 = vector.shape_cast %212 : vector<1x8x1xf32> to vector<8x1xf32>
    %214 = arith.truncf %203 : vector<8x128xf32> to vector<8x128xbf16>
    %c0_90 = arith.constant 0 : index
    %c0_91 = arith.constant 0 : index
    %215 = vector.load %arg4[%c0_90, %c0_91] : memref<128x128xbf16, #tpu.memory_space<vmem>>, vector<128x128xbf16>
    %cst_92 = arith.constant dense<0.000000e+00> : vector<8x128xf32>
    %216 = tpu.matmul %214, %215, %cst_92 {dimension_numbers = #tpu.dot_dimension_numbers<[1], [0], [0], [1], [0, 0, 1, 1], [], []>} : vector<8x128xbf16>, vector<128x128xbf16>, vector<8x128xf32> -> vector<8x128xf32>
    %217 = vector.extract_strided_slice %210 {offsets = [0, 0], sizes = [8, 128], strides = [1, 1]} : vector<8x256xf32> to vector<8x128xf32>
    %218 = arith.addf %217, %216 : vector<8x128xf32>
    %219 = arith.negf %218 : vector<8x128xf32>
    %220 = math.exp %219 : vector<8x128xf32>
    %cst_93 = arith.constant 1.000000e+00 : f32
    %221 = vector.broadcast %cst_93 : f32 to vector<8x128xf32>
    %222 = arith.addf %221, %220 : vector<8x128xf32>
    %223 = arith.divf %221, %222 : vector<8x128xf32>
    %224 = arith.mulf %223, %203 : vector<8x128xf32>
    %225 = arith.truncf %224 : vector<8x128xf32> to vector<8x128xbf16>
    %c0_94 = arith.constant 0 : index
    %c0_95 = arith.constant 0 : index
    %226 = vector.load %arg5[%c0_94, %c0_95] : memref<128x128xbf16, #tpu.memory_space<vmem>>, vector<128x128xbf16>
    %cst_96 = arith.constant dense<0.000000e+00> : vector<8x128xf32>
    %227 = tpu.matmul %225, %226, %cst_96 {dimension_numbers = #tpu.dot_dimension_numbers<[1], [0], [0], [1], [0, 0, 1, 1], [], []>} : vector<8x128xbf16>, vector<128x128xbf16>, vector<8x128xf32> -> vector<8x128xf32>
    %228 = vector.extract_strided_slice %210 {offsets = [0, 128], sizes = [8, 128], strides = [1, 1]} : vector<8x256xf32> to vector<8x128xf32>
    %229 = arith.addf %228, %227 : vector<8x128xf32>
    %230 = math.tanh %229 : vector<8x128xf32>
    %231 = vector.broadcast %213 : vector<8x1xf32> to vector<8x128xf32>
    %232 = arith.mulf %231, %230 : vector<8x128xf32>
    %cst_97 = arith.constant 1.000000e+00 : f32
    %233 = vector.broadcast %cst_97 : f32 to vector<8x1xf32>
    %234 = arith.subf %233, %213 : vector<8x1xf32>
    %235 = vector.broadcast %234 : vector<8x1xf32> to vector<8x128xf32>
    %236 = arith.mulf %235, %203 : vector<8x128xf32>
    %237 = arith.addf %232, %236 : vector<8x128xf32>
    %238 = arith.index_cast %c6_i32 : i32 to index
    %c0_98 = arith.constant 0 : index
    %c0_99 = arith.constant 0 : index
    %239 = vector.load %arg7[%238, %c0_98, %c0_99] : memref<8x8x128xf32, #tpu.memory_space<vmem>>, vector<1x8x128xf32>
    %240 = vector.shape_cast %239 : vector<1x8x128xf32> to vector<8x128xf32>
    %241 = vector.shape_cast %237 : vector<8x128xf32> to vector<1x8x128xf32>
    tpu.vector_store %arg7[%238, %c0_98, %c0_99], %241 {strides = array<i32>} : memref<8x8x128xf32, #tpu.memory_space<vmem>>, vector<1x8x128xf32>,
    %c7_i32 = arith.constant 7 : i32
    %242 = arith.index_cast %c7_i32 : i32 to index
    %c0_100 = arith.constant 0 : index
    %c0_101 = arith.constant 0 : index
    %243 = vector.load %arg2[%242, %c0_100, %c0_101] : memref<8x8x256xf32, #tpu.memory_space<vmem>>, vector<1x8x256xf32>
    %244 = vector.shape_cast %243 : vector<1x8x256xf32> to vector<8x256xf32>
    %245 = arith.index_cast %c7_i32 : i32 to index
    %c0_102 = arith.constant 0 : index
    %c0_103 = arith.constant 0 : index
    %246 = vector.load %arg3[%245, %c0_102, %c0_103] : memref<8x8x1xf32, #tpu.memory_space<vmem>>, vector<1x8x1xf32>
    %247 = vector.shape_cast %246 : vector<1x8x1xf32> to vector<8x1xf32>
    %248 = arith.truncf %237 : vector<8x128xf32> to vector<8x128xbf16>
    %c0_104 = arith.constant 0 : index
    %c0_105 = arith.constant 0 : index
    %249 = vector.load %arg4[%c0_104, %c0_105] : memref<128x128xbf16, #tpu.memory_space<vmem>>, vector<128x128xbf16>
    %cst_106 = arith.constant dense<0.000000e+00> : vector<8x128xf32>
    %250 = tpu.matmul %248, %249, %cst_106 {dimension_numbers = #tpu.dot_dimension_numbers<[1], [0], [0], [1], [0, 0, 1, 1], [], []>} : vector<8x128xbf16>, vector<128x128xbf16>, vector<8x128xf32> -> vector<8x128xf32>
    %251 = vector.extract_strided_slice %244 {offsets = [0, 0], sizes = [8, 128], strides = [1, 1]} : vector<8x256xf32> to vector<8x128xf32>
    %252 = arith.addf %251, %250 : vector<8x128xf32>
    %253 = arith.negf %252 : vector<8x128xf32>
    %254 = math.exp %253 : vector<8x128xf32>
    %cst_107 = arith.constant 1.000000e+00 : f32
    %255 = vector.broadcast %cst_107 : f32 to vector<8x128xf32>
    %256 = arith.addf %255, %254 : vector<8x128xf32>
    %257 = arith.divf %255, %256 : vector<8x128xf32>
    %258 = arith.mulf %257, %237 : vector<8x128xf32>
    %259 = arith.truncf %258 : vector<8x128xf32> to vector<8x128xbf16>
    %c0_108 = arith.constant 0 : index
    %c0_109 = arith.constant 0 : index
    %260 = vector.load %arg5[%c0_108, %c0_109] : memref<128x128xbf16, #tpu.memory_space<vmem>>, vector<128x128xbf16>
    %cst_110 = arith.constant dense<0.000000e+00> : vector<8x128xf32>
    %261 = tpu.matmul %259, %260, %cst_110 {dimension_numbers = #tpu.dot_dimension_numbers<[1], [0], [0], [1], [0, 0, 1, 1], [], []>} : vector<8x128xbf16>, vector<128x128xbf16>, vector<8x128xf32> -> vector<8x128xf32>
    %262 = vector.extract_strided_slice %244 {offsets = [0, 128], sizes = [8, 128], strides = [1, 1]} : vector<8x256xf32> to vector<8x128xf32>
    %263 = arith.addf %262, %261 : vector<8x128xf32>
    %264 = math.tanh %263 : vector<8x128xf32>
    %265 = vector.broadcast %247 : vector<8x1xf32> to vector<8x128xf32>
    %266 = arith.mulf %265, %264 : vector<8x128xf32>
    %cst_111 = arith.constant 1.000000e+00 : f32
    %267 = vector.broadcast %cst_111 : f32 to vector<8x1xf32>
    %268 = arith.subf %267, %247 : vector<8x1xf32>
    %269 = vector.broadcast %268 : vector<8x1xf32> to vector<8x128xf32>
    %270 = arith.mulf %269, %237 : vector<8x128xf32>
    %271 = arith.addf %266, %270 : vector<8x128xf32>
    %272 = arith.index_cast %c7_i32 : i32 to index
    %c0_112 = arith.constant 0 : index
    %c0_113 = arith.constant 0 : index
    %273 = vector.load %arg7[%272, %c0_112, %c0_113] : memref<8x8x128xf32, #tpu.memory_space<vmem>>, vector<1x8x128xf32>
    %274 = vector.shape_cast %273 : vector<1x8x128xf32> to vector<8x128xf32>
    %275 = vector.shape_cast %271 : vector<8x128xf32> to vector<1x8x128xf32>
    tpu.vector_store %arg7[%272, %c0_112, %c0_113], %275 {strides = array<i32>} : memref<8x8x128xf32, #tpu.memory_space<vmem>>, vector<1x8x128xf32>,
    %c8_i32 = arith.constant 8 : i32
    %c0_114 = arith.constant 0 : index
    %c0_115 = arith.constant 0 : index
    %276 = vector.load %arg8[%c0_114, %c0_115] : memref<8x128xf32, #tpu.memory_space<vmem>>, vector<8x128xf32>
    tpu.vector_store %arg8[%c0_114, %c0_115], %271 {strides = array<i32>} : memref<8x128xf32, #tpu.memory_space<vmem>>, vector<8x128xf32>,
    return
  }
  func.func @transform_0(%arg0: i32, %arg1: i32) -> (i32, i32, i32) {
    %c0_i32 = arith.constant 0 : i32
    %c0_i32_0 = arith.constant 0 : i32
    return %arg1, %arg0, %c0_i32 : i32, i32, i32
  }
  func.func @transform_1(%arg0: i32, %arg1: i32) -> (i32, i32, i32) {
    %c0_i32 = arith.constant 0 : i32
    %c0_i32_0 = arith.constant 0 : i32
    return %arg1, %arg0, %c0_i32 : i32, i32, i32
  }
  func.func @transform_2(%arg0: i32, %arg1: i32) -> (i32, i32) {
    %c0_i32 = arith.constant 0 : i32
    %c0_i32_0 = arith.constant 0 : i32
    %c0_i32_1 = arith.constant 0 : i32
    return %c0_i32, %c0_i32_0 : i32, i32
  }
  func.func @transform_3(%arg0: i32, %arg1: i32) -> (i32, i32) {
    %c0_i32 = arith.constant 0 : i32
    %c0_i32_0 = arith.constant 0 : i32
    %c0_i32_1 = arith.constant 0 : i32
    return %c0_i32, %c0_i32_0 : i32, i32
  }
  func.func @transform_4(%arg0: i32, %arg1: i32) -> (i32, i32) {
    %c0_i32 = arith.constant 0 : i32
    %c0_i32_0 = arith.constant 0 : i32
    return %arg0, %c0_i32 : i32, i32
  }
  func.func @transform_5(%arg0: i32, %arg1: i32) -> (i32, i32, i32) {
    %c0_i32 = arith.constant 0 : i32
    %c0_i32_0 = arith.constant 0 : i32
    return %arg1, %arg0, %c0_i32 : i32, i32, i32
  }
}

</mosaic_0001>

<llo_original>
// kernel: tpu_custom_call.1
$region0: #{tpu_custom_call.1}
  #allocation0 [shape = 'u32[]', space=smem, size = 0x4, offset = 0x4, fixed_abs, tag = 'smem constant byte address 0x4 - core index']
  #allocation1 [shape = 'u32[72,128]{1,0:T(1,128)}', space=vmem, size = 0x9000, scoped, tag = 'internal scratch']
  #allocation2 [shape = 'f32[8,128]{1,0:T(8,128)}', space=vmem, size = 0x1000, scoped, tag = 'scratch operand']
  %s0 = inlined_call_operand.hbm [shape: f32[8,8,256], index: 0, kind: input, shape index: {}]
  %s1 = inlined_call_operand.vmem [shape: f32[8,8,1], index: 1, kind: input, shape index: {}]
  %s2 = inlined_call_operand.vmem [shape: bf16[128,128], index: 2, kind: input, shape index: {}]
  %s3 = inlined_call_operand.hbm [shape: bf16[128,128], index: 3, kind: input, shape index: {}]
  %s4 = inlined_call_operand.vmem [shape: f32[8,128], index: 4, kind: input, shape index: {}]
  %s5 = inlined_call_operand.hbm [shape: f32[8,8,128], index: 5, kind: output, shape index: {}]
  %s6 = sld [smem:[#allocation0]]
  $region42: #{tpu_custom_call.1} parent=0
    _
  %s8 = ssub.s32 1, %s6
  %s9 = scalar_select 0, %s8, %s6
  $region1: #{tpu_custom_call.1} parent=0
    #allocation3 [shape = 'u8[65536]{0}', space=vmem, size = 0x10000, scoped, tag = 'input window, operand 0, single buffered']
    #allocation4 [shape = 's32[1]{0}', space=sflag, size = 0x4, scoped, tag = 'scoped memory for tpu_custom_call.1']
    #allocation5 [shape = 's32[1]{0}', space=sflag, size = 0x4, scoped, tag = 'scoped memory for tpu_custom_call.1']
    #allocation6 [shape = 'u8[32768]{0}', space=vmem, size = 0x8000, scoped, tag = 'input window, operand 3, single buffered']
    #allocation7 [shape = 's32[1]{0}', space=sflag, size = 0x4, scoped, tag = 'scoped memory for tpu_custom_call.1']
    #allocation8 [shape = 'u8[32768]{0}', space=vmem, size = 0x8000, scoped, tag = 'output window, operand 0, single buffered']
    %10 = vsyncpa [#allocation4], 0
    %11 = vsyncpa [#allocation7], 0
    %12 = vsyncpa [#allocation5], 0
    // Predicated region
    $region2: #{tpu_custom_call.1} parent=1 // pred_check
      _
    $region3: #{tpu_custom_call.1} parent=1 // pred_check_branch
      %14 = sbr.rel (0) target = $region5
    $region4: #{tpu_custom_call.1} parent=1 // pred_region
      %16 = vsyncadd [#allocation4], 0
      %s17 = sshll.u32 %s0, 4
      %s18 = int_to_ptr.hbm [resolvable:$true] %s17
      %s19 = sshll.u32 [#allocation3], 4
      %s20 = int_to_ptr.vmem [resolvable:$true] %s19
      %25 = dma.hbm_to_vmem [thread:$0]  %s18, 2048, %s20, [#allocation4], 256, 256, 16
    $region5: #{tpu_custom_call.1} parent=1 // pred_fallthru
      _
    // Predicated region
    $region6: #{tpu_custom_call.1} parent=1 // pred_check
      _
    $region7: #{tpu_custom_call.1} parent=1 // pred_check_branch
      %27 = sbr.rel (0) target = $region9
    $region8: #{tpu_custom_call.1} parent=1 // pred_region
      _
    $region9: #{tpu_custom_call.1} parent=1 // pred_fallthru
      _
    // Predicated region
    $region10: #{tpu_custom_call.1} parent=1 // pred_check
      _
    $region11: #{tpu_custom_call.1} parent=1 // pred_check_branch
      %29 = sbr.rel (0) target = $region13
    $region12: #{tpu_custom_call.1} parent=1 // pred_region
      _
    $region13: #{tpu_custom_call.1} parent=1 // pred_fallthru
      _
    // Predicated region
    $region14: #{tpu_custom_call.1} parent=1 // pred_check
      _
    $region15: #{tpu_custom_call.1} parent=1 // pred_check_branch
      %31 = sbr.rel (0) target = $region17
    $region16: #{tpu_custom_call.1} parent=1 // pred_region
      %33 = vsyncadd [#allocation7], 0
      %s34 = sshll.u32 %s3, 4
      %s35 = int_to_ptr.hbm [resolvable:$true] %s34
      %s36 = sshll.u32 [#allocation6], 4
      %s37 = int_to_ptr.vmem [resolvable:$true] %s36
      %42 = dma.hbm_to_vmem [thread:$0]  %s35, 1024, %s37, [#allocation7], 64, 64, 4
    $region17: #{tpu_custom_call.1} parent=1 // pred_fallthru
      _
    // Predicated region
    $region18: #{tpu_custom_call.1} parent=1 // pred_check
      _
    $region19: #{tpu_custom_call.1} parent=1 // pred_check_branch
      %44 = sbr.rel (0) target = $region21
    $region20: #{tpu_custom_call.1} parent=1 // pred_region
      _
    $region21: #{tpu_custom_call.1} parent=1 // pred_fallthru
      _
    // Predicated region
    $region22: #{tpu_custom_call.1} parent=1 // pred_check
      _
    $region23: #{tpu_custom_call.1} parent=1 // pred_check_branch
      %46 = sbr.rel (0) target = $region25
    $region24: #{tpu_custom_call.1} parent=1 // pred_region
      %48 = dma.done [#allocation4], 2048
    $region25: #{tpu_custom_call.1} parent=1 // pred_fallthru
      _
    // Predicated region
    $region26: #{tpu_custom_call.1} parent=1 // pred_check
      _
    $region27: #{tpu_custom_call.1} parent=1 // pred_check_branch
      %50 = sbr.rel (0) target = $region29
    $region28: #{tpu_custom_call.1} parent=1 // pred_region
      %52 = dma.done [#allocation7], 1024
    $region29: #{tpu_custom_call.1} parent=1 // pred_fallthru
      _
    %p53 = scmp.eq.s32.totalorder 0, 0
    // Predicated region
    $region30: #{tpu_custom_call.1} parent=1 // pred_check
      %p54 = pneg %p53
    $region31: #{tpu_custom_call.1} parent=1 // pred_check_branch
      %56 = sbr.rel (%p54) target = $region33
    $region32: #{tpu_custom_call.1} parent=1 // pred_region
      %v57 = vld [vmem:[%s4] sm:$0xff]
      %58 = vst [vmem:[#allocation2] sm:$0xff] %v57
    $region33: #{tpu_custom_call.1} parent=1 // pred_fallthru
      _
    %v59 = vld [vmem:[#allocation2] sm:$0xff]
    %v60 = vld [vmem:[#allocation3] sm:$0xff]
    %v61 = vld [vmem:[#allocation3 + $0x8] sm:$0xff]
    %v62 = vld [vmem:[%s1] sm:$0xff]
    %v63 = vpack.c.bf16 %v59, %v59
    %v64 = vld [vmem:[%s2] sm:$0xf]
    %v65 = vld [vmem:[%s2 + $0x4] sm:$0xf]
    %v66 = vld [vmem:[%s2 + $0x8] sm:$0xf]
    %v67 = vld [vmem:[%s2 + $0xc] sm:$0xf]
    %v68 = vld [vmem:[%s2 + $0x10] sm:$0xf]
    %v69 = vld [vmem:[%s2 + $0x14] sm:$0xf]
    %v70 = vld [vmem:[%s2 + $0x18] sm:$0xf]
    %v71 = vld [vmem:[%s2 + $0x1c] sm:$0xf]
    %v72 = vld [vmem:[%s2 + $0x20] sm:$0xf]
    %v73 = vld [vmem:[%s2 + $0x24] sm:$0xf]
    %v74 = vld [vmem:[%s2 + $0x28] sm:$0xf]
    %v75 = vld [vmem:[%s2 + $0x2c] sm:$0xf]
    %v76 = vld [vmem:[%s2 + $0x30] sm:$0xf]
    %v77 = vld [vmem:[%s2 + $0x34] sm:$0xf]
    %v78 = vld [vmem:[%s2 + $0x38] sm:$0xf]
    %v79 = vld [vmem:[%s2 + $0x3c] sm:$0xf]
    %v96 = vunpack.c.l.b16 %v64
    %v97 = vunpack.c.l.b16 %v65
    %v98 = vunpack.c.l.b16 %v66
    %v99 = vunpack.c.l.b16 %v67
    %v100 = vunpack.c.l.b16 %v68
    %v101 = vunpack.c.l.b16 %v69
    %v102 = vunpack.c.l.b16 %v70
    %v103 = vunpack.c.l.b16 %v71
    %v104 = vunpack.c.l.b16 %v72
    %v105 = vunpack.c.l.b16 %v73
    %v106 = vunpack.c.l.b16 %v74
    %v107 = vunpack.c.l.b16 %v75
    %v108 = vunpack.c.l.b16 %v76
    %v109 = vunpack.c.l.b16 %v77
    %v110 = vunpack.c.l.b16 %v78
    %v111 = vunpack.c.l.b16 %v79
    %v112 = vpack.c.b16 %v97, %v96
    %v113 = vpack.c.b16 %v99, %v98
    %v114 = vpack.c.b16 %v101, %v100
    %v115 = vpack.c.b16 %v103, %v102
    %v116 = vpack.c.b16 %v105, %v104
    %v117 = vpack.c.b16 %v107, %v106
    %v118 = vpack.c.b16 %v109, %v108
    %v119 = vpack.c.b16 %v111, %v110
    %128 = vmatpush.bf16.msra.mxu0 %v119
    %129 = vmatpush.bf16.msra.mxu0 %v118
    %130 = vmatpush.bf16.msra.mxu0 %v117
    %131 = vmatpush.bf16.msra.mxu0 %v116
    %132 = vmatpush.bf16.msra.mxu0 %v115
    %133 = vmatpush.bf16.msra.mxu0 %v114
    %134 = vmatpush.bf16.msra.mxu0 %v113
    %135 = vmatpush.bf16.msra.mxu0 %v112
    %136 = vmatmul.bf16.gmra.mxu0 %v63
    %v137 = vpop.f32.mrf.mxu0
    %v138 = vadd.f32 0.0, %v137
    %v139 = vpop.f32.mrf.mxu0
    %140 = vdwg.mxu0
    %v141 = vadd.f32 %v60, %v138
    %v142 = vxor.u32 %v141, 2147483648
    %v143 = vmul.f32 %v142, 1.442695
    %v144 = vpow.pop %v143
    %v145 = vadd.f32 %v144, 1.0
    %v146 = vrcp.pop %v145
    %v147 = vmul.f32 %v145, %v146
    %v148 = vsub.f32 1.0, %v147
    %v149 = vmul.f32 %v146, %v148
    %v150 = vadd.f32 %v146, %v149
    %vm151 = vweird.f32 %v145
    %vm152 = vweird.f32 %v146
    %vm153 = vmor %vm151, %vm152
    %v154 = vsel %vm153, %v146, %v150
    %v155 = vand.u32 2147483647, %v145
    %vm156 = vcmp.eq.f32.partialorder %v155, 8.507059e+37
    %v157 = vand.u32 %v145, 2147483648
    %v158 = vor.u32 1.1754944e-38, %v157
    %v159 = vsel %vm156, %v158, %v154
    %v160 = vmul.f32 1.0, %v159
    %v161 = vmul.f32 %v160, %v59
    %v162 = vpack.c.bf16 %v161, %v161
    %v163 = vld [vmem:[#allocation6] sm:$0xf]
    %v164 = vld [vmem:[#allocation6 + $0x4] sm:$0xf]
    %v165 = vld [vmem:[#allocation6 + $0x8] sm:$0xf]
    %v166 = vld [vmem:[#allocation6 + $0xc] sm:$0xf]
    %v167 = vld [vmem:[#allocation6 + $0x10] sm:$0xf]
    %v168 = vld [vmem:[#allocation6 + $0x14] sm:$0xf]
    %v169 = vld [vmem:[#allocation6 + $0x18] sm:$0xf]
    %v170 = vld [vmem:[#allocation6 + $0x1c] sm:$0xf]
    %v171 = vld [vmem:[#allocation6 + $0x20] sm:$0xf]
    %v172 = vld [vmem:[#allocation6 + $0x24] sm:$0xf]
    %v173 = vld [vmem:[#allocation6 + $0x28] sm:$0xf]
    %v174 = vld [vmem:[#allocation6 + $0x2c] sm:$0xf]
    %v175 = vld [vmem:[#allocation6 + $0x30] sm:$0xf]
    %v176 = vld [vmem:[#allocation6 + $0x34] sm:$0xf]
    %v177 = vld [vmem:[#allocation6 + $0x38] sm:$0xf]
    %v178 = vld [vmem:[#allocation6 + $0x3c] sm:$0xf]
    %v195 = vunpack.c.l.b16 %v163
    %v196 = vunpack.c.l.b16 %v164
    %v197 = vunpack.c.l.b16 %v165
    %v198 = vunpack.c.l.b16 %v166
    %v199 = vunpack.c.l.b16 %v167
    %v200 = vunpack.c.l.b16 %v168
    %v201 = vunpack.c.l.b16 %v169
    %v202 = vunpack.c.l.b16 %v170
    %v203 = vunpack.c.l.b16 %v171
    %v204 = vunpack.c.l.b16 %v172
    %v205 = vunpack.c.l.b16 %v173
    %v206 = vunpack.c.l.b16 %v174
    %v207 = vunpack.c.l.b16 %v175
    %v208 = vunpack.c.l.b16 %v176
    %v209 = vunpack.c.l.b16 %v177
    %v210 = vunpack.c.l.b16 %v178
    %v211 = vpack.c.b16 %v196, %v195
    %v212 = vpack.c.b16 %v198, %v197
    %v213 = vpack.c.b16 %v200, %v199
    %v214 = vpack.c.b16 %v202, %v201
    %v215 = vpack.c.b16 %v204, %v203
    %v216 = vpack.c.b16 %v206, %v205
    %v217 = vpack.c.b16 %v208, %v207
    %v218 = vpack.c.b16 %v210, %v209
    %227 = vmatpush.bf16.msra.mxu0 %v218
    %228 = vmatpush.bf16.msra.mxu0 %v217
    %229 = vmatpush.bf16.msra.mxu0 %v216
    %230 = vmatpush.bf16.msra.mxu0 %v215
    %231 = vmatpush.bf16.msra.mxu0 %v214
    %232 = vmatpush.bf16.msra.mxu0 %v213
    %233 = vmatpush.bf16.msra.mxu0 %v212
    %234 = vmatpush.bf16.msra.mxu0 %v211
    %235 = vmatmul.bf16.gmra.mxu0 %v162
    %v236 = vpop.f32.mrf.mxu0
    %v237 = vadd.f32 0.0, %v236
    %v238 = vpop.f32.mrf.mxu0
    %239 = vdwg.mxu0
    %v240 = vadd.f32 %v61, %v237
    %v241 = vtanh.pop %v240
    %243 = vset.pattern.permute.xlu0 0
    %244 = vperm.xlu0 %243, %v62
    %v245 = vpop.permute.xlu0 %244
    %v247 = vmul.f32 %v245, %v241
    %v248 = vsub.f32 1.0, %v62
    %250 = vset.pattern.permute.xlu0 0
    %251 = vperm.xlu0 %250, %v248
    %v252 = vpop.permute.xlu0 %251
    %v254 = vmul.f32 %v252, %v59
    %v255 = vadd.f32 %v247, %v254
    %256 = vst [vmem:[#allocation8] sm:$0xff] %v255
    %s257 = scalar_lea.vmem [#allocation3], 16
    %v258 = vld [vmem:[%s257] sm:$0xff]
    %v259 = vld [vmem:[%s257 + $0x8] sm:$0xff]
    %s260 = scalar_lea.vmem %s1, 8
    %v261 = vld [vmem:[%s260] sm:$0xff]
    %v262 = vpack.c.bf16 %v255, %v255
    %v263 = vld [vmem:[%s2] sm:$0xf]
    %v264 = vld [vmem:[%s2 + $0x4] sm:$0xf]
    %v265 = vld [vmem:[%s2 + $0x8] sm:$0xf]
    %v266 = vld [vmem:[%s2 + $0xc] sm:$0xf]
    %v267 = vld [vmem:[%s2 + $0x10] sm:$0xf]
    %v268 = vld [vmem:[%s2 + $0x14] sm:$0xf]
    %v269 = vld [vmem:[%s2 + $0x18] sm:$0xf]
    %v270 = vld [vmem:[%s2 + $0x1c] sm:$0xf]
    %v271 = vld [vmem:[%s2 + $0x20] sm:$0xf]
    %v272 = vld [vmem:[%s2 + $0x24] sm:$0xf]
    %v273 = vld [vmem:[%s2 + $0x28] sm:$0xf]
    %v274 = vld [vmem:[%s2 + $0x2c] sm:$0xf]
    %v275 = vld [vmem:[%s2 + $0x30] sm:$0xf]
    %v276 = vld [vmem:[%s2 + $0x34] sm:$0xf]
    %v277 = vld [vmem:[%s2 + $0x38] sm:$0xf]
    %v278 = vld [vmem:[%s2 + $0x3c] sm:$0xf]
    %v295 = vunpack.c.l.b16 %v263
    %v296 = vunpack.c.l.b16 %v264
    %v297 = vunpack.c.l.b16 %v265
    %v298 = vunpack.c.l.b16 %v266
    %v299 = vunpack.c.l.b16 %v267
    %v300 = vunpack.c.l.b16 %v268
    %v301 = vunpack.c.l.b16 %v269
    %v302 = vunpack.c.l.b16 %v270
    %v303 = vunpack.c.l.b16 %v271
    %v304 = vunpack.c.l.b16 %v272
    %v305 = vunpack.c.l.b16 %v273
    %v306 = vunpack.c.l.b16 %v274
    %v307 = vunpack.c.l.b16 %v275
    %v308 = vunpack.c.l.b16 %v276
    %v309 = vunpack.c.l.b16 %v277
    %v310 = vunpack.c.l.b16 %v278
    %v311 = vpack.c.b16 %v296, %v295
    %v312 = vpack.c.b16 %v298, %v297
    %v313 = vpack.c.b16 %v300, %v299
    %v314 = vpack.c.b16 %v302, %v301
    %v315 = vpack.c.b16 %v304, %v303
    %v316 = vpack.c.b16 %v306, %v305
    %v317 = vpack.c.b16 %v308, %v307
    %v318 = vpack.c.b16 %v310, %v309
    %327 = vmatpush.bf16.msra.mxu0 %v318
    %328 = vmatpush.bf16.msra.mxu0 %v317
    %329 = vmatpush.bf16.msra.mxu0 %v316
    %330 = vmatpush.bf16.msra.mxu0 %v315
    %331 = vmatpush.bf16.msra.mxu0 %v314
    %332 = vmatpush.bf16.msra.mxu0 %v313
    %333 = vmatpush.bf16.msra.mxu0 %v312
    %334 = vmatpush.bf16.msra.mxu0 %v311
    %335 = vmatmul.bf16.gmra.mxu0 %v262
    %v336 = vpop.f32.mrf.mxu0
    %v337 = vadd.f32 0.0, %v336
    %v338 = vpop.f32.mrf.mxu0
    %339 = vdwg.mxu0
    %v340 = vadd.f32 %v258, %v337
    %v341 = vxor.u32 %v340, 2147483648
    %v342 = vmul.f32 %v341, 1.442695
    %v343 = vpow.pop %v342
    %v344 = vadd.f32 %v343, 1.0
    %v345 = vrcp.pop %v344
    %v346 = vmul.f32 %v344, %v345
    %v347 = vsub.f32 1.0, %v346
    %v348 = vmul.f32 %v345, %v347
    %v349 = vadd.f32 %v345, %v348
    %vm350 = vweird.f32 %v344
    %vm351 = vweird.f32 %v345
    %vm352 = vmor %vm350, %vm351
    %v353 = vsel %vm352, %v345, %v349
    %v354 = vand.u32 2147483647, %v344
    %vm355 = vcmp.eq.f32.partialorder %v354, 8.507059e+37
    %v356 = vand.u32 %v344, 2147483648
    %v357 = vor.u32 1.1754944e-38, %v356
    %v358 = vsel %vm355, %v357, %v353
    %v359 = vmul.f32 1.0, %v358
    %v360 = vmul.f32 %v359, %v255
    %v361 = vpack.c.bf16 %v360, %v360
    %v362 = vld [vmem:[#allocation6] sm:$0xf]
    %v363 = vld [vmem:[#allocation6 + $0x4] sm:$0xf]
    %v364 = vld [vmem:[#allocation6 + $0x8] sm:$0xf]
    %v365 = vld [vmem:[#allocation6 + $0xc] sm:$0xf]
    %v366 = vld [vmem:[#allocation6 + $0x10] sm:$0xf]
    %v367 = vld [vmem:[#allocation6 + $0x14] sm:$0xf]
    %v368 = vld [vmem:[#allocation6 + $0x18] sm:$0xf]
    %v369 = vld [vmem:[#allocation6 + $0x1c] sm:$0xf]
    %v370 = vld [vmem:[#allocation6 + $0x20] sm:$0xf]
    %v371 = vld [vmem:[#allocation6 + $0x24] sm:$0xf]
    %v372 = vld [vmem:[#allocation6 + $0x28] sm:$0xf]
    %v373 = vld [vmem:[#allocation6 + $0x2c] sm:$0xf]
    %v374 = vld [vmem:[#allocation6 + $0x30] sm:$0xf]
    %v375 = vld [vmem:[#allocation6 + $0x34] sm:$0xf]
    %v376 = vld [vmem:[#allocation6 + $0x38] sm:$0xf]
    %v377 = vld [vmem:[#allocation6 + $0x3c] sm:$0xf]
    %v394 = vunpack.c.l.b16 %v362
    %v395 = vunpack.c.l.b16 %v363
    %v396 = vunpack.c.l.b16 %v364
    %v397 = vunpack.c.l.b16 %v365
    %v398 = vunpack.c.l.b16 %v366
    %v399 = vunpack.c.l.b16 %v367
    %v400 = vunpack.c.l.b16 %v368
    %v401 = vunpack.c.l.b16 %v369
    %v402 = vunpack.c.l.b16 %v370
    %v403 = vunpack.c.l.b16 %v371
    %v404 = vunpack.c.l.b16 %v372
    %v405 = vunpack.c.l.b16 %v373
    %v406 = vunpack.c.l.b16 %v374
    %v407 = vunpack.c.l.b16 %v375
    %v408 = vunpack.c.l.b16 %v376
    %v409 = vunpack.c.l.b16 %v377
    %v410 = vpack.c.b16 %v395, %v394
    %v411 = vpack.c.b16 %v397, %v396
    %v412 = vpack.c.b16 %v399, %v398
    %v413 = vpack.c.b16 %v401, %v400
    %v414 = vpack.c.b16 %v403, %v402
    %v415 = vpack.c.b16 %v405, %v404
    %v416 = vpack.c.b16 %v407, %v406
    %v417 = vpack.c.b16 %v409, %v408
    %426 = vmatpush.bf16.msra.mxu0 %v417
    %427 = vmatpush.bf16.msra.mxu0 %v416
    %428 = vmatpush.bf16.msra.mxu0 %v415
    %429 = vmatpush.bf16.msra.mxu0 %v414
    %430 = vmatpush.bf16.msra.mxu0 %v413
    %431 = vmatpush.bf16.msra.mxu0 %v412
    %432 = vmatpush.bf16.msra.mxu0 %v411
    %433 = vmatpush.bf16.msra.mxu0 %v410
    %434 = vmatmul.bf16.gmra.mxu0 %v361
    %v435 = vpop.f32.mrf.mxu0
    %v436 = vadd.f32 0.0, %v435
    %v437 = vpop.f32.mrf.mxu0
    %438 = vdwg.mxu0
    %v439 = vadd.f32 %v259, %v436
    %v440 = vtanh.pop %v439
    %442 = vset.pattern.permute.xlu0 0
    %443 = vperm.xlu0 %442, %v261
    %v444 = vpop.permute.xlu0 %443
    %v446 = vmul.f32 %v444, %v440
    %v447 = vsub.f32 1.0, %v261
    %449 = vset.pattern.permute.xlu0 0
    %450 = vperm.xlu0 %449, %v447
    %v451 = vpop.permute.xlu0 %450
    %v453 = vmul.f32 %v451, %v255
    %v454 = vadd.f32 %v446, %v453
    %s455 = scalar_lea.vmem [#allocation8], 8
    %456 = vst [vmem:[%s455] sm:$0xff] %v454
    %s457 = scalar_lea.vmem [#allocation3], 32
    %v458 = vld [vmem:[%s457] sm:$0xff]
    %v459 = vld [vmem:[%s457 + $0x8] sm:$0xff]
    %s460 = scalar_lea.vmem %s1, 16
    %v461 = vld [vmem:[%s460] sm:$0xff]
    %v462 = vpack.c.bf16 %v454, %v454
    %v463 = vld [vmem:[%s2] sm:$0xf]
    %v464 = vld [vmem:[%s2 + $0x4] sm:$0xf]
    %v465 = vld [vmem:[%s2 + $0x8] sm:$0xf]
    %v466 = vld [vmem:[%s2 + $0xc] sm:$0xf]
    %v467 = vld [vmem:[%s2 + $0x10] sm:$0xf]
    %v468 = vld [vmem:[%s2 + $0x14] sm:$0xf]
    %v469 = vld [vmem:[%s2 + $0x18] sm:$0xf]
    %v470 = vld [vmem:[%s2 + $0x1c] sm:$0xf]
    %v471 = vld [vmem:[%s2 + $0x20] sm:$0xf]
    %v472 = vld [vmem:[%s2 + $0x24] sm:$0xf]
    %v473 = vld [vmem:[%s2 + $0x28] sm:$0xf]
    %v474 = vld [vmem:[%s2 + $0x2c] sm:$0xf]
    %v475 = vld [vmem:[%s2 + $0x30] sm:$0xf]
    %v476 = vld [vmem:[%s2 + $0x34] sm:$0xf]
    %v477 = vld [vmem:[%s2 + $0x38] sm:$0xf]
    %v478 = vld [vmem:[%s2 + $0x3c] sm:$0xf]
    %v495 = vunpack.c.l.b16 %v463
    %v496 = vunpack.c.l.b16 %v464
    %v497 = vunpack.c.l.b16 %v465
    %v498 = vunpack.c.l.b16 %v466
    %v499 = vunpack.c.l.b16 %v467
    %v500 = vunpack.c.l.b16 %v468
    %v501 = vunpack.c.l.b16 %v469
    %v502 = vunpack.c.l.b16 %v470
    %v503 = vunpack.c.l.b16 %v471
    %v504 = vunpack.c.l.b16 %v472
    %v505 = vunpack.c.l.b16 %v473
    %v506 = vunpack.c.l.b16 %v474
    %v507 = vunpack.c.l.b16 %v475
    %v508 = vunpack.c.l.b16 %v476
    %v509 = vunpack.c.l.b16 %v477
    %v510 = vunpack.c.l.b16 %v478
    %v511 = vpack.c.b16 %v496, %v495
    %v512 = vpack.c.b16 %v498, %v497
    %v513 = vpack.c.b16 %v500, %v499
    %v514 = vpack.c.b16 %v502, %v501
    %v515 = vpack.c.b16 %v504, %v503
    %v516 = vpack.c.b16 %v506, %v505
    %v517 = vpack.c.b16 %v508, %v507
    %v518 = vpack.c.b16 %v510, %v509
    %527 = vmatpush.bf16.msra.mxu0 %v518
    %528 = vmatpush.bf16.msra.mxu0 %v517
    %529 = vmatpush.bf16.msra.mxu0 %v516
    %530 = vmatpush.bf16.msra.mxu0 %v515
    %531 = vmatpush.bf16.msra.mxu0 %v514
    %532 = vmatpush.bf16.msra.mxu0 %v513
    %533 = vmatpush.bf16.msra.mxu0 %v512
    %534 = vmatpush.bf16.msra.mxu0 %v511
    %535 = vmatmul.bf16.gmra.mxu0 %v462
    %v536 = vpop.f32.mrf.mxu0
    %v537 = vadd.f32 0.0, %v536
    %v538 = vpop.f32.mrf.mxu0
    %539 = vdwg.mxu0
    %v540 = vadd.f32 %v458, %v537
    %v541 = vxor.u32 %v540, 2147483648
    %v542 = vmul.f32 %v541, 1.442695
    %v543 = vpow.pop %v542
    %v544 = vadd.f32 %v543, 1.0
    %v545 = vrcp.pop %v544
    %v546 = vmul.f32 %v544, %v545
    %v547 = vsub.f32 1.0, %v546
    %v548 = vmul.f32 %v545, %v547
    %v549 = vadd.f32 %v545, %v548
    %vm550 = vweird.f32 %v544
    %vm551 = vweird.f32 %v545
    %vm552 = vmor %vm550, %vm551
    %v553 = vsel %vm552, %v545, %v549
    %v554 = vand.u32 2147483647, %v544
    %vm555 = vcmp.eq.f32.partialorder %v554, 8.507059e+37
    %v556 = vand.u32 %v544, 2147483648
    %v557 = vor.u32 1.1754944e-38, %v556
    %v558 = vsel %vm555, %v557, %v553
    %v559 = vmul.f32 1.0, %v558
    %v560 = vmul.f32 %v559, %v454
    %v561 = vpack.c.bf16 %v560, %v560
    %v562 = vld [vmem:[#allocation6] sm:$0xf]
    %v563 = vld [vmem:[#allocation6 + $0x4] sm:$0xf]
    %v564 = vld [vmem:[#allocation6 + $0x8] sm:$0xf]
    %v565 = vld [vmem:[#allocation6 + $0xc] sm:$0xf]
    %v566 = vld [vmem:[#allocation6 + $0x10] sm:$0xf]
    %v567 = vld [vmem:[#allocation6 + $0x14] sm:$0xf]
    %v568 = vld [vmem:[#allocation6 + $0x18] sm:$0xf]
    %v569 = vld [vmem:[#allocation6 + $0x1c] sm:$0xf]
    %v570 = vld [vmem:[#allocation6 + $0x20] sm:$0xf]
    %v571 = vld [vmem:[#allocation6 + $0x24] sm:$0xf]
    %v572 = vld [vmem:[#allocation6 + $0x28] sm:$0xf]
    %v573 = vld [vmem:[#allocation6 + $0x2c] sm:$0xf]
    %v574 = vld [vmem:[#allocation6 + $0x30] sm:$0xf]
    %v575 = vld [vmem:[#allocation6 + $0x34] sm:$0xf]
    %v576 = vld [vmem:[#allocation6 + $0x38] sm:$0xf]
    %v577 = vld [vmem:[#allocation6 + $0x3c] sm:$0xf]
    %v594 = vunpack.c.l.b16 %v562
    %v595 = vunpack.c.l.b16 %v563
    %v596 = vunpack.c.l.b16 %v564
    %v597 = vunpack.c.l.b16 %v565
    %v598 = vunpack.c.l.b16 %v566
    %v599 = vunpack.c.l.b16 %v567
    %v600 = vunpack.c.l.b16 %v568
    %v601 = vunpack.c.l.b16 %v569
    %v602 = vunpack.c.l.b16 %v570
    %v603 = vunpack.c.l.b16 %v571
    %v604 = vunpack.c.l.b16 %v572
    %v605 = vunpack.c.l.b16 %v573
    %v606 = vunpack.c.l.b16 %v574
    %v607 = vunpack.c.l.b16 %v575
    %v608 = vunpack.c.l.b16 %v576
    %v609 = vunpack.c.l.b16 %v577
    %v610 = vpack.c.b16 %v595, %v594
    %v611 = vpack.c.b16 %v597, %v596
    %v612 = vpack.c.b16 %v599, %v598
    %v613 = vpack.c.b16 %v601, %v600
    %v614 = vpack.c.b16 %v603, %v602
    %v615 = vpack.c.b16 %v605, %v604
    %v616 = vpack.c.b16 %v607, %v606
    %v617 = vpack.c.b16 %v609, %v608
    %626 = vmatpush.bf16.msra.mxu0 %v617
    %627 = vmatpush.bf16.msra.mxu0 %v616
    %628 = vmatpush.bf16.msra.mxu0 %v615
    %629 = vmatpush.bf16.msra.mxu0 %v614
    %630 = vmatpush.bf16.msra.mxu0 %v613
    %631 = vmatpush.bf16.msra.mxu0 %v612
    %632 = vmatpush.bf16.msra.mxu0 %v611
    %633 = vmatpush.bf16.msra.mxu0 %v610
    %634 = vmatmul.bf16.gmra.mxu0 %v561
    %v635 = vpop.f32.mrf.mxu0
    %v636 = vadd.f32 0.0, %v635
    %v637 = vpop.f32.mrf.mxu0
    %638 = vdwg.mxu0
    %v639 = vadd.f32 %v459, %v636
    %v640 = vtanh.pop %v639
    %642 = vset.pattern.permute.xlu0 0
    %643 = vperm.xlu0 %642, %v461
    %v644 = vpop.permute.xlu0 %643
    %v646 = vmul.f32 %v644, %v640
    %v647 = vsub.f32 1.0, %v461
    %649 = vset.pattern.permute.xlu0 0
    %650 = vperm.xlu0 %649, %v647
    %v651 = vpop.permute.xlu0 %650
    %v653 = vmul.f32 %v651, %v454
    %v654 = vadd.f32 %v646, %v653
    %s655 = scalar_lea.vmem [#allocation8], 16
    %656 = vst [vmem:[%s655] sm:$0xff] %v654
    %s657 = scalar_lea.vmem [#allocation3], 48
    %v658 = vld [vmem:[%s657] sm:$0xff]
    %v659 = vld [vmem:[%s657 + $0x8] sm:$0xff]
    %s660 = scalar_lea.vmem %s1, 24
    %v661 = vld [vmem:[%s660] sm:$0xff]
    %v662 = vpack.c.bf16 %v654, %v654
    %v663 = vld [vmem:[%s2] sm:$0xf]
    %v664 = vld [vmem:[%s2 + $0x4] sm:$0xf]
    %v665 = vld [vmem:[%s2 + $0x8] sm:$0xf]
    %v666 = vld [vmem:[%s2 + $0xc] sm:$0xf]
    %v667 = vld [vmem:[%s2 + $0x10] sm:$0xf]
    %v668 = vld [vmem:[%s2 + $0x14] sm:$0xf]
    %v669 = vld [vmem:[%s2 + $0x18] sm:$0xf]
    %v670 = vld [vmem:[%s2 + $0x1c] sm:$0xf]
    %v671 = vld [vmem:[%s2 + $0x20] sm:$0xf]
    %v672 = vld [vmem:[%s2 + $0x24] sm:$0xf]
    %v673 = vld [vmem:[%s2 + $0x28] sm:$0xf]
    %v674 = vld [vmem:[%s2 + $0x2c] sm:$0xf]
    %v675 = vld [vmem:[%s2 + $0x30] sm:$0xf]
    %v676 = vld [vmem:[%s2 + $0x34] sm:$0xf]
    %v677 = vld [vmem:[%s2 + $0x38] sm:$0xf]
    %v678 = vld [vmem:[%s2 + $0x3c] sm:$0xf]
    %v695 = vunpack.c.l.b16 %v663
    %v696 = vunpack.c.l.b16 %v664
    %v697 = vunpack.c.l.b16 %v665
    %v698 = vunpack.c.l.b16 %v666
    %v699 = vunpack.c.l.b16 %v667
    %v700 = vunpack.c.l.b16 %v668
    %v701 = vunpack.c.l.b16 %v669
    %v702 = vunpack.c.l.b16 %v670
    %v703 = vunpack.c.l.b16 %v671
    %v704 = vunpack.c.l.b16 %v672
    %v705 = vunpack.c.l.b16 %v673
    %v706 = vunpack.c.l.b16 %v674
    %v707 = vunpack.c.l.b16 %v675
    %v708 = vunpack.c.l.b16 %v676
    %v709 = vunpack.c.l.b16 %v677
    %v710 = vunpack.c.l.b16 %v678
    %v711 = vpack.c.b16 %v696, %v695
    %v712 = vpack.c.b16 %v698, %v697
    %v713 = vpack.c.b16 %v700, %v699
    %v714 = vpack.c.b16 %v702, %v701
    %v715 = vpack.c.b16 %v704, %v703
    %v716 = vpack.c.b16 %v706, %v705
    %v717 = vpack.c.b16 %v708, %v707
    %v718 = vpack.c.b16 %v710, %v709
    %727 = vmatpush.bf16.msra.mxu0 %v718
    %728 = vmatpush.bf16.msra.mxu0 %v717
    %729 = vmatpush.bf16.msra.mxu0 %v716
    %730 = vmatpush.bf16.msra.mxu0 %v715
    %731 = vmatpush.bf16.msra.mxu0 %v714
    %732 = vmatpush.bf16.msra.mxu0 %v713
    %733 = vmatpush.bf16.msra.mxu0 %v712
    %734 = vmatpush.bf16.msra.mxu0 %v711
    %735 = vmatmul.bf16.gmra.mxu0 %v662
    %v736 = vpop.f32.mrf.mxu0
    %v737 = vadd.f32 0.0, %v736
    %v738 = vpop.f32.mrf.mxu0
    %739 = vdwg.mxu0
    %v740 = vadd.f32 %v658, %v737
    %v741 = vxor.u32 %v740, 2147483648
    %v742 = vmul.f32 %v741, 1.442695
    %v743 = vpow.pop %v742
    %v744 = vadd.f32 %v743, 1.0
    %v745 = vrcp.pop %v744
    %v746 = vmul.f32 %v744, %v745
    %v747 = vsub.f32 1.0, %v746
    %v748 = vmul.f32 %v745, %v747
    %v749 = vadd.f32 %v745, %v748
    %vm750 = vweird.f32 %v744
    %vm751 = vweird.f32 %v745
    %vm752 = vmor %vm750, %vm751
    %v753 = vsel %vm752, %v745, %v749
    %v754 = vand.u32 2147483647, %v744
    %vm755 = vcmp.eq.f32.partialorder %v754, 8.507059e+37
    %v756 = vand.u32 %v744, 2147483648
    %v757 = vor.u32 1.1754944e-38, %v756
    %v758 = vsel %vm755, %v757, %v753
    %v759 = vmul.f32 1.0, %v758
    %v760 = vmul.f32 %v759, %v654
    %v761 = vpack.c.bf16 %v760, %v760
    %v762 = vld [vmem:[#allocation6] sm:$0xf]
    %v763 = vld [vmem:[#allocation6 + $0x4] sm:$0xf]
    %v764 = vld [vmem:[#allocation6 + $0x8] sm:$0xf]
    %v765 = vld [vmem:[#allocation6 + $0xc] sm:$0xf]
    %v766 = vld [vmem:[#allocation6 + $0x10] sm:$0xf]
    %v767 = vld [vmem:[#allocation6 + $0x14] sm:$0xf]
    %v768 = vld [vmem:[#allocation6 + $0x18] sm:$0xf]
    %v769 = vld [vmem:[#allocation6 + $0x1c] sm:$0xf]
    %v770 = vld [vmem:[#allocation6 + $0x20] sm:$0xf]
    %v771 = vld [vmem:[#allocation6 + $0x24] sm:$0xf]
    %v772 = vld [vmem:[#allocation6 + $0x28] sm:$0xf]
    %v773 = vld [vmem:[#allocation6 + $0x2c] sm:$0xf]
    %v774 = vld [vmem:[#allocation6 + $0x30] sm:$0xf]
    %v775 = vld [vmem:[#allocation6 + $0x34] sm:$0xf]
    %v776 = vld [vmem:[#allocation6 + $0x38] sm:$0xf]
    %v777 = vld [vmem:[#allocation6 + $0x3c] sm:$0xf]
    %v794 = vunpack.c.l.b16 %v762
    %v795 = vunpack.c.l.b16 %v763
    %v796 = vunpack.c.l.b16 %v764
    %v797 = vunpack.c.l.b16 %v765
    %v798 = vunpack.c.l.b16 %v766
    %v799 = vunpack.c.l.b16 %v767
    %v800 = vunpack.c.l.b16 %v768
    %v801 = vunpack.c.l.b16 %v769
    %v802 = vunpack.c.l.b16 %v770
    %v803 = vunpack.c.l.b16 %v771
    %v804 = vunpack.c.l.b16 %v772
    %v805 = vunpack.c.l.b16 %v773
    %v806 = vunpack.c.l.b16 %v774
    %v807 = vunpack.c.l.b16 %v775
    %v808 = vunpack.c.l.b16 %v776
    %v809 = vunpack.c.l.b16 %v777
    %v810 = vpack.c.b16 %v795, %v794
    %v811 = vpack.c.b16 %v797, %v796
    %v812 = vpack.c.b16 %v799, %v798
    %v813 = vpack.c.b16 %v801, %v800
    %v814 = vpack.c.b16 %v803, %v802
    %v815 = vpack.c.b16 %v805, %v804
    %v816 = vpack.c.b16 %v807, %v806
    %v817 = vpack.c.b16 %v809, %v808
    %826 = vmatpush.bf16.msra.mxu0 %v817
    %827 = vmatpush.bf16.msra.mxu0 %v816
    %828 = vmatpush.bf16.msra.mxu0 %v815
    %829 = vmatpush.bf16.msra.mxu0 %v814
    %830 = vmatpush.bf16.msra.mxu0 %v813
    %831 = vmatpush.bf16.msra.mxu0 %v812
    %832 = vmatpush.bf16.msra.mxu0 %v811
    %833 = vmatpush.bf16.msra.mxu0 %v810
    %834 = vmatmul.bf16.gmra.mxu0 %v761
    %v835 = vpop.f32.mrf.mxu0
    %v836 = vadd.f32 0.0, %v835
    %v837 = vpop.f32.mrf.mxu0
    %838 = vdwg.mxu0
    %v839 = vadd.f32 %v659, %v836
    %v840 = vtanh.pop %v839
    %842 = vset.pattern.permute.xlu0 0
    %843 = vperm.xlu0 %842, %v661
    %v844 = vpop.permute.xlu0 %843
    %v846 = vmul.f32 %v844, %v840
    %v847 = vsub.f32 1.0, %v661
    %849 = vset.pattern.permute.xlu0 0
    %850 = vperm.xlu0 %849, %v847
    %v851 = vpop.permute.xlu0 %850
    %v853 = vmul.f32 %v851, %v654
    %v854 = vadd.f32 %v846, %v853
    %s855 = scalar_lea.vmem [#allocation8], 24
    %856 = vst [vmem:[%s855] sm:$0xff] %v854
    %s857 = scalar_lea.vmem [#allocation3], 64
    %v858 = vld [vmem:[%s857] sm:$0xff]
    %v859 = vld [vmem:[%s857 + $0x8] sm:$0xff]
    %s860 = scalar_lea.vmem %s1, 32
    %v861 = vld [vmem:[%s860] sm:$0xff]
    %v862 = vpack.c.bf16 %v854, %v854
    %v863 = vld [vmem:[%s2] sm:$0xf]
    %v864 = vld [vmem:[%s2 + $0x4] sm:$0xf]
    %v865 = vld [vmem:[%s2 + $0x8] sm:$0xf]
    %v866 = vld [vmem:[%s2 + $0xc] sm:$0xf]
    %v867 = vld [vmem:[%s2 + $0x10] sm:$0xf]
    %v868 = vld [vmem:[%s2 + $0x14] sm:$0xf]
    %v869 = vld [vmem:[%s2 + $0x18] sm:$0xf]
    %v870 = vld [vmem:[%s2 + $0x1c] sm:$0xf]
    %v871 = vld [vmem:[%s2 + $0x20] sm:$0xf]
    %v872 = vld [vmem:[%s2 + $0x24] sm:$0xf]
    %v873 = vld [vmem:[%s2 + $0x28] sm:$0xf]
    %v874 = vld [vmem:[%s2 + $0x2c] sm:$0xf]
    %v875 = vld [vmem:[%s2 + $0x30] sm:$0xf]
    %v876 = vld [vmem:[%s2 + $0x34] sm:$0xf]
    %v877 = vld [vmem:[%s2 + $0x38] sm:$0xf]
    %v878 = vld [vmem:[%s2 + $0x3c] sm:$0xf]
    %v895 = vunpack.c.l.b16 %v863
    %v896 = vunpack.c.l.b16 %v864
    %v897 = vunpack.c.l.b16 %v865
    %v898 = vunpack.c.l.b16 %v866
    %v899 = vunpack.c.l.b16 %v867
    %v900 = vunpack.c.l.b16 %v868
    %v901 = vunpack.c.l.b16 %v869
    %v902 = vunpack.c.l.b16 %v870
    %v903 = vunpack.c.l.b16 %v871
    %v904 = vunpack.c.l.b16 %v872
    %v905 = vunpack.c.l.b16 %v873
    %v906 = vunpack.c.l.b16 %v874
    %v907 = vunpack.c.l.b16 %v875
    %v908 = vunpack.c.l.b16 %v876
    %v909 = vunpack.c.l.b16 %v877
    %v910 = vunpack.c.l.b16 %v878
    %v911 = vpack.c.b16 %v896, %v895
    %v912 = vpack.c.b16 %v898, %v897
    %v913 = vpack.c.b16 %v900, %v899
    %v914 = vpack.c.b16 %v902, %v901
    %v915 = vpack.c.b16 %v904, %v903
    %v916 = vpack.c.b16 %v906, %v905
    %v917 = vpack.c.b16 %v908, %v907
    %v918 = vpack.c.b16 %v910, %v909
    %927 = vmatpush.bf16.msra.mxu0 %v918
    %928 = vmatpush.bf16.msra.mxu0 %v917
    %929 = vmatpush.bf16.msra.mxu0 %v916
    %930 = vmatpush.bf16.msra.mxu0 %v915
    %931 = vmatpush.bf16.msra.mxu0 %v914
    %932 = vmatpush.bf16.msra.mxu0 %v913
    %933 = vmatpush.bf16.msra.mxu0 %v912
    %934 = vmatpush.bf16.msra.mxu0 %v911
    %935 = vmatmul.bf16.gmra.mxu0 %v862
    %v936 = vpop.f32.mrf.mxu0
    %v937 = vadd.f32 0.0, %v936
    %v938 = vpop.f32.mrf.mxu0
    %939 = vdwg.mxu0
    %v940 = vadd.f32 %v858, %v937
    %v941 = vxor.u32 %v940, 2147483648
    %v942 = vmul.f32 %v941, 1.442695
    %v943 = vpow.pop %v942
    %v944 = vadd.f32 %v943, 1.0
    %v945 = vrcp.pop %v944
    %v946 = vmul.f32 %v944, %v945
    %v947 = vsub.f32 1.0, %v946
    %v948 = vmul.f32 %v945, %v947
    %v949 = vadd.f32 %v945, %v948
    %vm950 = vweird.f32 %v944
    %vm951 = vweird.f32 %v945
    %vm952 = vmor %vm950, %vm951
    %v953 = vsel %vm952, %v945, %v949
    %v954 = vand.u32 2147483647, %v944
    %vm955 = vcmp.eq.f32.partialorder %v954, 8.507059e+37
    %v956 = vand.u32 %v944, 2147483648
    %v957 = vor.u32 1.1754944e-38, %v956
    %v958 = vsel %vm955, %v957, %v953
    %v959 = vmul.f32 1.0, %v958
    %v960 = vmul.f32 %v959, %v854
    %v961 = vpack.c.bf16 %v960, %v960
    %v962 = vld [vmem:[#allocation6] sm:$0xf]
    %v963 = vld [vmem:[#allocation6 + $0x4] sm:$0xf]
    %v964 = vld [vmem:[#allocation6 + $0x8] sm:$0xf]
    %v965 = vld [vmem:[#allocation6 + $0xc] sm:$0xf]
    %v966 = vld [vmem:[#allocation6 + $0x10] sm:$0xf]
    %v967 = vld [vmem:[#allocation6 + $0x14] sm:$0xf]
    %v968 = vld [vmem:[#allocation6 + $0x18] sm:$0xf]
    %v969 = vld [vmem:[#allocation6 + $0x1c] sm:$0xf]
    %v970 = vld [vmem:[#allocation6 + $0x20] sm:$0xf]
    %v971 = vld [vmem:[#allocation6 + $0x24] sm:$0xf]
    %v972 = vld [vmem:[#allocation6 + $0x28] sm:$0xf]
    %v973 = vld [vmem:[#allocation6 + $0x2c] sm:$0xf]
    %v974 = vld [vmem:[#allocation6 + $0x30] sm:$0xf]
    %v975 = vld [vmem:[#allocation6 + $0x34] sm:$0xf]
    %v976 = vld [vmem:[#allocation6 + $0x38] sm:$0xf]
    %v977 = vld [vmem:[#allocation6 + $0x3c] sm:$0xf]
    %v994 = vunpack.c.l.b16 %v962
    %v995 = vunpack.c.l.b16 %v963
    %v996 = vunpack.c.l.b16 %v964
    %v997 = vunpack.c.l.b16 %v965
    %v998 = vunpack.c.l.b16 %v966
    %v999 = vunpack.c.l.b16 %v967
    %v1000 = vunpack.c.l.b16 %v968
    %v1001 = vunpack.c.l.b16 %v969
    %v1002 = vunpack.c.l.b16 %v970
    %v1003 = vunpack.c.l.b16 %v971
    %v1004 = vunpack.c.l.b16 %v972
    %v1005 = vunpack.c.l.b16 %v973
    %v1006 = vunpack.c.l.b16 %v974
    %v1007 = vunpack.c.l.b16 %v975
    %v1008 = vunpack.c.l.b16 %v976
    %v1009 = vunpack.c.l.b16 %v977
    %v1010 = vpack.c.b16 %v995, %v994
    %v1011 = vpack.c.b16 %v997, %v996
    %v1012 = vpack.c.b16 %v999, %v998
    %v1013 = vpack.c.b16 %v1001, %v1000
    %v1014 = vpack.c.b16 %v1003, %v1002
    %v1015 = vpack.c.b16 %v1005, %v1004
    %v1016 = vpack.c.b16 %v1007, %v1006
    %v1017 = vpack.c.b16 %v1009, %v1008
    %1026 = vmatpush.bf16.msra.mxu0 %v1017
    %1027 = vmatpush.bf16.msra.mxu0 %v1016
    %1028 = vmatpush.bf16.msra.mxu0 %v1015
    %1029 = vmatpush.bf16.msra.mxu0 %v1014
    %1030 = vmatpush.bf16.msra.mxu0 %v1013
    %1031 = vmatpush.bf16.msra.mxu0 %v1012
    %1032 = vmatpush.bf16.msra.mxu0 %v1011
    %1033 = vmatpush.bf16.msra.mxu0 %v1010
    %1034 = vmatmul.bf16.gmra.mxu0 %v961
    %v1035 = vpop.f32.mrf.mxu0
    %v1036 = vadd.f32 0.0, %v1035
    %v1037 = vpop.f32.mrf.mxu0
    %1038 = vdwg.mxu0
    %v1039 = vadd.f32 %v859, %v1036
    %v1040 = vtanh.pop %v1039
    %1042 = vset.pattern.permute.xlu0 0
    %1043 = vperm.xlu0 %1042, %v861
    %v1044 = vpop.permute.xlu0 %1043
    %v1046 = vmul.f32 %v1044, %v1040
    %v1047 = vsub.f32 1.0, %v861
    %1049 = vset.pattern.permute.xlu0 0
    %1050 = vperm.xlu0 %1049, %v1047
    %v1051 = vpop.permute.xlu0 %1050
    %v1053 = vmul.f32 %v1051, %v854
    %v1054 = vadd.f32 %v1046, %v1053
    %s1055 = scalar_lea.vmem [#allocation8], 32
    %1056 = vst [vmem:[%s1055] sm:$0xff] %v1054
    %s1057 = scalar_lea.vmem [#allocation3], 80
    %v1058 = vld [vmem:[%s1057] sm:$0xff]
    %v1059 = vld [vmem:[%s1057 + $0x8] sm:$0xff]
    %s1060 = scalar_lea.vmem %s1, 40
    %v1061 = vld [vmem:[%s1060] sm:$0xff]
    %v1062 = vpack.c.bf16 %v1054, %v1054
    %v1063 = vld [vmem:[%s2] sm:$0xf]
    %v1064 = vld [vmem:[%s2 + $0x4] sm:$0xf]
    %v1065 = vld [vmem:[%s2 + $0x8] sm:$0xf]
    %v1066 = vld [vmem:[%s2 + $0xc] sm:$0xf]
    %v1067 = vld [vmem:[%s2 + $0x10] sm:$0xf]
    %v1068 = vld [vmem:[%s2 + $0x14] sm:$0xf]
    %v1069 = vld [vmem:[%s2 + $0x18] sm:$0xf]
    %v1070 = vld [vmem:[%s2 + $0x1c] sm:$0xf]
    %v1071 = vld [vmem:[%s2 + $0x20] sm:$0xf]
    %v1072 = vld [vmem:[%s2 + $0x24] sm:$0xf]
    %v1073 = vld [vmem:[%s2 + $0x28] sm:$0xf]
    %v1074 = vld [vmem:[%s2 + $0x2c] sm:$0xf]
    %v1075 = vld [vmem:[%s2 + $0x30] sm:$0xf]
    %v1076 = vld [vmem:[%s2 + $0x34] sm:$0xf]
    %v1077 = vld [vmem:[%s2 + $0x38] sm:$0xf]
    %v1078 = vld [vmem:[%s2 + $0x3c] sm:$0xf]
    %v1095 = vunpack.c.l.b16 %v1063
    %v1096 = vunpack.c.l.b16 %v1064
    %v1097 = vunpack.c.l.b16 %v1065
    %v1098 = vunpack.c.l.b16 %v1066
    %v1099 = vunpack.c.l.b16 %v1067
    %v1100 = vunpack.c.l.b16 %v1068
    %v1101 = vunpack.c.l.b16 %v1069
    %v1102 = vunpack.c.l.b16 %v1070
    %v1103 = vunpack.c.l.b16 %v1071
    %v1104 = vunpack.c.l.b16 %v1072
    %v1105 = vunpack.c.l.b16 %v1073
    %v1106 = vunpack.c.l.b16 %v1074
    %v1107 = vunpack.c.l.b16 %v1075
    %v1108 = vunpack.c.l.b16 %v1076
    %v1109 = vunpack.c.l.b16 %v1077
    %v1110 = vunpack.c.l.b16 %v1078
    %v1111 = vpack.c.b16 %v1096, %v1095
    %v1112 = vpack.c.b16 %v1098, %v1097
    %v1113 = vpack.c.b16 %v1100, %v1099
    %v1114 = vpack.c.b16 %v1102, %v1101
    %v1115 = vpack.c.b16 %v1104, %v1103
    %v1116 = vpack.c.b16 %v1106, %v1105
    %v1117 = vpack.c.b16 %v1108, %v1107
    %v1118 = vpack.c.b16 %v1110, %v1109
    %1127 = vmatpush.bf16.msra.mxu0 %v1118
    %1128 = vmatpush.bf16.msra.mxu0 %v1117
    %1129 = vmatpush.bf16.msra.mxu0 %v1116
    %1130 = vmatpush.bf16.msra.mxu0 %v1115
    %1131 = vmatpush.bf16.msra.mxu0 %v1114
    %1132 = vmatpush.bf16.msra.mxu0 %v1113
    %1133 = vmatpush.bf16.msra.mxu0 %v1112
    %1134 = vmatpush.bf16.msra.mxu0 %v1111
    %1135 = vmatmul.bf16.gmra.mxu0 %v1062
    %v1136 = vpop.f32.mrf.mxu0
    %v1137 = vadd.f32 0.0, %v1136
    %v1138 = vpop.f32.mrf.mxu0
    %1139 = vdwg.mxu0
    %v1140 = vadd.f32 %v1058, %v1137
    %v1141 = vxor.u32 %v1140, 2147483648
    %v1142 = vmul.f32 %v1141, 1.442695
    %v1143 = vpow.pop %v1142
    %v1144 = vadd.f32 %v1143, 1.0
    %v1145 = vrcp.pop %v1144
    %v1146 = vmul.f32 %v1144, %v1145
    %v1147 = vsub.f32 1.0, %v1146
    %v1148 = vmul.f32 %v1145, %v1147
    %v1149 = vadd.f32 %v1145, %v1148
    %vm1150 = vweird.f32 %v1144
    %vm1151 = vweird.f32 %v1145
    %vm1152 = vmor %vm1150, %vm1151
    %v1153 = vsel %vm1152, %v1145, %v1149
    %v1154 = vand.u32 2147483647, %v1144
    %vm1155 = vcmp.eq.f32.partialorder %v1154, 8.507059e+37
    %v1156 = vand.u32 %v1144, 2147483648
    %v1157 = vor.u32 1.1754944e-38, %v1156
    %v1158 = vsel %vm1155, %v1157, %v1153
    %v1159 = vmul.f32 1.0, %v1158
    %v1160 = vmul.f32 %v1159, %v1054
    %v1161 = vpack.c.bf16 %v1160, %v1160
    %v1162 = vld [vmem:[#allocation6] sm:$0xf]
    %v1163 = vld [vmem:[#allocation6 + $0x4] sm:$0xf]
    %v1164 = vld [vmem:[#allocation6 + $0x8] sm:$0xf]
    %v1165 = vld [vmem:[#allocation6 + $0xc] sm:$0xf]
    %v1166 = vld [vmem:[#allocation6 + $0x10] sm:$0xf]
    %v1167 = vld [vmem:[#allocation6 + $0x14] sm:$0xf]
    %v1168 = vld [vmem:[#allocation6 + $0x18] sm:$0xf]
    %v1169 = vld [vmem:[#allocation6 + $0x1c] sm:$0xf]
    %v1170 = vld [vmem:[#allocation6 + $0x20] sm:$0xf]
    %v1171 = vld [vmem:[#allocation6 + $0x24] sm:$0xf]
    %v1172 = vld [vmem:[#allocation6 + $0x28] sm:$0xf]
    %v1173 = vld [vmem:[#allocation6 + $0x2c] sm:$0xf]
    %v1174 = vld [vmem:[#allocation6 + $0x30] sm:$0xf]
    %v1175 = vld [vmem:[#allocation6 + $0x34] sm:$0xf]
    %v1176 = vld [vmem:[#allocation6 + $0x38] sm:$0xf]
    %v1177 = vld [vmem:[#allocation6 + $0x3c] sm:$0xf]
    %v1194 = vunpack.c.l.b16 %v1162
    %v1195 = vunpack.c.l.b16 %v1163
    %v1196 = vunpack.c.l.b16 %v1164
    %v1197 = vunpack.c.l.b16 %v1165
    %v1198 = vunpack.c.l.b16 %v1166
    %v1199 = vunpack.c.l.b16 %v1167
    %v1200 = vunpack.c.l.b16 %v1168
    %v1201 = vunpack.c.l.b16 %v1169
    %v1202 = vunpack.c.l.b16 %v1170
    %v1203 = vunpack.c.l.b16 %v1171
    %v1204 = vunpack.c.l.b16 %v1172
    %v1205 = vunpack.c.l.b16 %v1173
    %v1206 = vunpack.c.l.b16 %v1174
    %v1207 = vunpack.c.l.b16 %v1175
    %v1208 = vunpack.c.l.b16 %v1176
    %v1209 = vunpack.c.l.b16 %v1177
    %v1210 = vpack.c.b16 %v1195, %v1194
    %v1211 = vpack.c.b16 %v1197, %v1196
    %v1212 = vpack.c.b16 %v1199, %v1198
    %v1213 = vpack.c.b16 %v1201, %v1200
    %v1214 = vpack.c.b16 %v1203, %v1202
    %v1215 = vpack.c.b16 %v1205, %v1204
    %v1216 = vpack.c.b16 %v1207, %v1206
    %v1217 = vpack.c.b16 %v1209, %v1208
    %1226 = vmatpush.bf16.msra.mxu0 %v1217
    %1227 = vmatpush.bf16.msra.mxu0 %v1216
    %1228 = vmatpush.bf16.msra.mxu0 %v1215
    %1229 = vmatpush.bf16.msra.mxu0 %v1214
    %1230 = vmatpush.bf16.msra.mxu0 %v1213
    %1231 = vmatpush.bf16.msra.mxu0 %v1212
    %1232 = vmatpush.bf16.msra.mxu0 %v1211
    %1233 = vmatpush.bf16.msra.mxu0 %v1210
    %1234 = vmatmul.bf16.gmra.mxu0 %v1161
    %v1235 = vpop.f32.mrf.mxu0
    %v1236 = vadd.f32 0.0, %v1235
    %v1237 = vpop.f32.mrf.mxu0
    %1238 = vdwg.mxu0
    %v1239 = vadd.f32 %v1059, %v1236
    %v1240 = vtanh.pop %v1239
    %1242 = vset.pattern.permute.xlu0 0
    %1243 = vperm.xlu0 %1242, %v1061
    %v1244 = vpop.permute.xlu0 %1243
    %v1246 = vmul.f32 %v1244, %v1240
    %v1247 = vsub.f32 1.0, %v1061
    %1249 = vset.pattern.permute.xlu0 0
    %1250 = vperm.xlu0 %1249, %v1247
    %v1251 = vpop.permute.xlu0 %1250
    %v1253 = vmul.f32 %v1251, %v1054
    %v1254 = vadd.f32 %v1246, %v1253
    %s1255 = scalar_lea.vmem [#allocation8], 40
    %1256 = vst [vmem:[%s1255] sm:$0xff] %v1254
    %s1257 = scalar_lea.vmem [#allocation3], 96
    %v1258 = vld [vmem:[%s1257] sm:$0xff]
    %v1259 = vld [vmem:[%s1257 + $0x8] sm:$0xff]
    %s1260 = scalar_lea.vmem %s1, 48
    %v1261 = vld [vmem:[%s1260] sm:$0xff]
    %v1262 = vpack.c.bf16 %v1254, %v1254
    %v1263 = vld [vmem:[%s2] sm:$0xf]
    %v1264 = vld [vmem:[%s2 + $0x4] sm:$0xf]
    %v1265 = vld [vmem:[%s2 + $0x8] sm:$0xf]
    %v1266 = vld [vmem:[%s2 + $0xc] sm:$0xf]
    %v1267 = vld [vmem:[%s2 + $0x10] sm:$0xf]
    %v1268 = vld [vmem:[%s2 + $0x14] sm:$0xf]
    %v1269 = vld [vmem:[%s2 + $0x18] sm:$0xf]
    %v1270 = vld [vmem:[%s2 + $0x1c] sm:$0xf]
    %v1271 = vld [vmem:[%s2 + $0x20] sm:$0xf]
    %v1272 = vld [vmem:[%s2 + $0x24] sm:$0xf]
    %v1273 = vld [vmem:[%s2 + $0x28] sm:$0xf]
    %v1274 = vld [vmem:[%s2 + $0x2c] sm:$0xf]
    %v1275 = vld [vmem:[%s2 + $0x30] sm:$0xf]
    %v1276 = vld [vmem:[%s2 + $0x34] sm:$0xf]
    %v1277 = vld [vmem:[%s2 + $0x38] sm:$0xf]
    %v1278 = vld [vmem:[%s2 + $0x3c] sm:$0xf]
    %v1295 = vunpack.c.l.b16 %v1263
    %v1296 = vunpack.c.l.b16 %v1264
    %v1297 = vunpack.c.l.b16 %v1265
    %v1298 = vunpack.c.l.b16 %v1266
    %v1299 = vunpack.c.l.b16 %v1267
    %v1300 = vunpack.c.l.b16 %v1268
    %v1301 = vunpack.c.l.b16 %v1269
    %v1302 = vunpack.c.l.b16 %v1270
    %v1303 = vunpack.c.l.b16 %v1271
    %v1304 = vunpack.c.l.b16 %v1272
    %v1305 = vunpack.c.l.b16 %v1273
    %v1306 = vunpack.c.l.b16 %v1274
    %v1307 = vunpack.c.l.b16 %v1275
    %v1308 = vunpack.c.l.b16 %v1276
    %v1309 = vunpack.c.l.b16 %v1277
    %v1310 = vunpack.c.l.b16 %v1278
    %v1311 = vpack.c.b16 %v1296, %v1295
    %v1312 = vpack.c.b16 %v1298, %v1297
    %v1313 = vpack.c.b16 %v1300, %v1299
    %v1314 = vpack.c.b16 %v1302, %v1301
    %v1315 = vpack.c.b16 %v1304, %v1303
    %v1316 = vpack.c.b16 %v1306, %v1305
    %v1317 = vpack.c.b16 %v1308, %v1307
    %v1318 = vpack.c.b16 %v1310, %v1309
    %1327 = vmatpush.bf16.msra.mxu0 %v1318
    %1328 = vmatpush.bf16.msra.mxu0 %v1317
    %1329 = vmatpush.bf16.msra.mxu0 %v1316
    %1330 = vmatpush.bf16.msra.mxu0 %v1315
    %1331 = vmatpush.bf16.msra.mxu0 %v1314
    %1332 = vmatpush.bf16.msra.mxu0 %v1313
    %1333 = vmatpush.bf16.msra.mxu0 %v1312
    %1334 = vmatpush.bf16.msra.mxu0 %v1311
    %1335 = vmatmul.bf16.gmra.mxu0 %v1262
    %v1336 = vpop.f32.mrf.mxu0
    %v1337 = vadd.f32 0.0, %v1336
    %v1338 = vpop.f32.mrf.mxu0
    %1339 = vdwg.mxu0
    %v1340 = vadd.f32 %v1258, %v1337
    %v1341 = vxor.u32 %v1340, 2147483648
    %v1342 = vmul.f32 %v1341, 1.442695
    %v1343 = vpow.pop %v1342
    %v1344 = vadd.f32 %v1343, 1.0
    %v1345 = vrcp.pop %v1344
    %v1346 = vmul.f32 %v1344, %v1345
    %v1347 = vsub.f32 1.0, %v1346
    %v1348 = vmul.f32 %v1345, %v1347
    %v1349 = vadd.f32 %v1345, %v1348
    %vm1350 = vweird.f32 %v1344
    %vm1351 = vweird.f32 %v1345
    %vm1352 = vmor %vm1350, %vm1351
    %v1353 = vsel %vm1352, %v1345, %v1349
    %v1354 = vand.u32 2147483647, %v1344
    %vm1355 = vcmp.eq.f32.partialorder %v1354, 8.507059e+37
    %v1356 = vand.u32 %v1344, 2147483648
    %v1357 = vor.u32 1.1754944e-38, %v1356
    %v1358 = vsel %vm1355, %v1357, %v1353
    %v1359 = vmul.f32 1.0, %v1358
    %v1360 = vmul.f32 %v1359, %v1254
    %v1361 = vpack.c.bf16 %v1360, %v1360
    %v1362 = vld [vmem:[#allocation6] sm:$0xf]
    %v1363 = vld [vmem:[#allocation6 + $0x4] sm:$0xf]
    %v1364 = vld [vmem:[#allocation6 + $0x8] sm:$0xf]
    %v1365 = vld [vmem:[#allocation6 + $0xc] sm:$0xf]
    %v1366 = vld [vmem:[#allocation6 + $0x10] sm:$0xf]
    %v1367 = vld [vmem:[#allocation6 + $0x14] sm:$0xf]
    %v1368 = vld [vmem:[#allocation6 + $0x18] sm:$0xf]
    %v1369 = vld [vmem:[#allocation6 + $0x1c] sm:$0xf]
    %v1370 = vld [vmem:[#allocation6 + $0x20] sm:$0xf]
    %v1371 = vld [vmem:[#allocation6 + $0x24] sm:$0xf]
    %v1372 = vld [vmem:[#allocation6 + $0x28] sm:$0xf]
    %v1373 = vld [vmem:[#allocation6 + $0x2c] sm:$0xf]
    %v1374 = vld [vmem:[#allocation6 + $0x30] sm:$0xf]
    %v1375 = vld [vmem:[#allocation6 + $0x34] sm:$0xf]
    %v1376 = vld [vmem:[#allocation6 + $0x38] sm:$0xf]
    %v1377 = vld [vmem:[#allocation6 + $0x3c] sm:$0xf]
    %v1394 = vunpack.c.l.b16 %v1362
    %v1395 = vunpack.c.l.b16 %v1363
    %v1396 = vunpack.c.l.b16 %v1364
    %v1397 = vunpack.c.l.b16 %v1365
    %v1398 = vunpack.c.l.b16 %v1366
    %v1399 = vunpack.c.l.b16 %v1367
    %v1400 = vunpack.c.l.b16 %v1368
    %v1401 = vunpack.c.l.b16 %v1369
    %v1402 = vunpack.c.l.b16 %v1370
    %v1403 = vunpack.c.l.b16 %v1371
    %v1404 = vunpack.c.l.b16 %v1372
    %v1405 = vunpack.c.l.b16 %v1373
    %v1406 = vunpack.c.l.b16 %v1374
    %v1407 = vunpack.c.l.b16 %v1375
    %v1408 = vunpack.c.l.b16 %v1376
    %v1409 = vunpack.c.l.b16 %v1377
    %v1410 = vpack.c.b16 %v1395, %v1394
    %v1411 = vpack.c.b16 %v1397, %v1396
    %v1412 = vpack.c.b16 %v1399, %v1398
    %v1413 = vpack.c.b16 %v1401, %v1400
    %v1414 = vpack.c.b16 %v1403, %v1402
    %v1415 = vpack.c.b16 %v1405, %v1404
    %v1416 = vpack.c.b16 %v1407, %v1406
    %v1417 = vpack.c.b16 %v1409, %v1408
    %1426 = vmatpush.bf16.msra.mxu0 %v1417
    %1427 = vmatpush.bf16.msra.mxu0 %v1416
    %1428 = vmatpush.bf16.msra.mxu0 %v1415
    %1429 = vmatpush.bf16.msra.mxu0 %v1414
    %1430 = vmatpush.bf16.msra.mxu0 %v1413
    %1431 = vmatpush.bf16.msra.mxu0 %v1412
    %1432 = vmatpush.bf16.msra.mxu0 %v1411
    %1433 = vmatpush.bf16.msra.mxu0 %v1410
    %1434 = vmatmul.bf16.gmra.mxu0 %v1361
    %v1435 = vpop.f32.mrf.mxu0
    %v1436 = vadd.f32 0.0, %v1435
    %v1437 = vpop.f32.mrf.mxu0
    %1438 = vdwg.mxu0
    %v1439 = vadd.f32 %v1259, %v1436
    %v1440 = vtanh.pop %v1439
    %1442 = vset.pattern.permute.xlu0 0
    %1443 = vperm.xlu0 %1442, %v1261
    %v1444 = vpop.permute.xlu0 %1443
    %v1446 = vmul.f32 %v1444, %v1440
    %v1447 = vsub.f32 1.0, %v1261
    %1449 = vset.pattern.permute.xlu0 0
    %1450 = vperm.xlu0 %1449, %v1447
    %v1451 = vpop.permute.xlu0 %1450
    %v1453 = vmul.f32 %v1451, %v1254
    %v1454 = vadd.f32 %v1446, %v1453
    %s1455 = scalar_lea.vmem [#allocation8], 48
    %1456 = vst [vmem:[%s1455] sm:$0xff] %v1454
    %s1457 = scalar_lea.vmem [#allocation3], 112
    %v1458 = vld [vmem:[%s1457] sm:$0xff]
    %v1459 = vld [vmem:[%s1457 + $0x8] sm:$0xff]
    %s1460 = scalar_lea.vmem %s1, 56
    %v1461 = vld [vmem:[%s1460] sm:$0xff]
    %v1462 = vpack.c.bf16 %v1454, %v1454
    %v1463 = vld [vmem:[%s2] sm:$0xf]
    %v1464 = vld [vmem:[%s2 + $0x4] sm:$0xf]
    %v1465 = vld [vmem:[%s2 + $0x8] sm:$0xf]
    %v1466 = vld [vmem:[%s2 + $0xc] sm:$0xf]
    %v1467 = vld [vmem:[%s2 + $0x10] sm:$0xf]
    %v1468 = vld [vmem:[%s2 + $0x14] sm:$0xf]
    %v1469 = vld [vmem:[%s2 + $0x18] sm:$0xf]
    %v1470 = vld [vmem:[%s2 + $0x1c] sm:$0xf]
    %v1471 = vld [vmem:[%s2 + $0x20] sm:$0xf]
    %v1472 = vld [vmem:[%s2 + $0x24] sm:$0xf]
    %v1473 = vld [vmem:[%s2 + $0x28] sm:$0xf]
    %v1474 = vld [vmem:[%s2 + $0x2c] sm:$0xf]
    %v1475 = vld [vmem:[%s2 + $0x30] sm:$0xf]
    %v1476 = vld [vmem:[%s2 + $0x34] sm:$0xf]
    %v1477 = vld [vmem:[%s2 + $0x38] sm:$0xf]
    %v1478 = vld [vmem:[%s2 + $0x3c] sm:$0xf]
    %v1495 = vunpack.c.l.b16 %v1463
    %v1496 = vunpack.c.l.b16 %v1464
    %v1497 = vunpack.c.l.b16 %v1465
    %v1498 = vunpack.c.l.b16 %v1466
    %v1499 = vunpack.c.l.b16 %v1467
    %v1500 = vunpack.c.l.b16 %v1468
    %v1501 = vunpack.c.l.b16 %v1469
    %v1502 = vunpack.c.l.b16 %v1470
    %v1503 = vunpack.c.l.b16 %v1471
    %v1504 = vunpack.c.l.b16 %v1472
    %v1505 = vunpack.c.l.b16 %v1473
    %v1506 = vunpack.c.l.b16 %v1474
    %v1507 = vunpack.c.l.b16 %v1475
    %v1508 = vunpack.c.l.b16 %v1476
    %v1509 = vunpack.c.l.b16 %v1477
    %v1510 = vunpack.c.l.b16 %v1478
    %v1511 = vpack.c.b16 %v1496, %v1495
    %v1512 = vpack.c.b16 %v1498, %v1497
    %v1513 = vpack.c.b16 %v1500, %v1499
    %v1514 = vpack.c.b16 %v1502, %v1501
    %v1515 = vpack.c.b16 %v1504, %v1503
    %v1516 = vpack.c.b16 %v1506, %v1505
    %v1517 = vpack.c.b16 %v1508, %v1507
    %v1518 = vpack.c.b16 %v1510, %v1509
    %1527 = vmatpush.bf16.msra.mxu0 %v1518
    %1528 = vmatpush.bf16.msra.mxu0 %v1517
    %1529 = vmatpush.bf16.msra.mxu0 %v1516
    %1530 = vmatpush.bf16.msra.mxu0 %v1515
    %1531 = vmatpush.bf16.msra.mxu0 %v1514
    %1532 = vmatpush.bf16.msra.mxu0 %v1513
    %1533 = vmatpush.bf16.msra.mxu0 %v1512
    %1534 = vmatpush.bf16.msra.mxu0 %v1511
    %1535 = vmatmul.bf16.gmra.mxu0 %v1462
    %v1536 = vpop.f32.mrf.mxu0
    %v1537 = vadd.f32 0.0, %v1536
    %v1538 = vpop.f32.mrf.mxu0
    %1539 = vdwg.mxu0
    %v1540 = vadd.f32 %v1458, %v1537
    %v1541 = vxor.u32 %v1540, 2147483648
    %v1542 = vmul.f32 %v1541, 1.442695
    %v1543 = vpow.pop %v1542
    %v1544 = vadd.f32 %v1543, 1.0
    %v1545 = vrcp.pop %v1544
    %v1546 = vmul.f32 %v1544, %v1545
    %v1547 = vsub.f32 1.0, %v1546
    %v1548 = vmul.f32 %v1545, %v1547
    %v1549 = vadd.f32 %v1545, %v1548
    %vm1550 = vweird.f32 %v1544
    %vm1551 = vweird.f32 %v1545
    %vm1552 = vmor %vm1550, %vm1551
    %v1553 = vsel %vm1552, %v1545, %v1549
    %v1554 = vand.u32 2147483647, %v1544
    %vm1555 = vcmp.eq.f32.partialorder %v1554, 8.507059e+37
    %v1556 = vand.u32 %v1544, 2147483648
    %v1557 = vor.u32 1.1754944e-38, %v1556
    %v1558 = vsel %vm1555, %v1557, %v1553
    %v1559 = vmul.f32 1.0, %v1558
    %v1560 = vmul.f32 %v1559, %v1454
    %v1561 = vpack.c.bf16 %v1560, %v1560
    %v1562 = vld [vmem:[#allocation6] sm:$0xf]
    %v1563 = vld [vmem:[#allocation6 + $0x4] sm:$0xf]
    %v1564 = vld [vmem:[#allocation6 + $0x8] sm:$0xf]
    %v1565 = vld [vmem:[#allocation6 + $0xc] sm:$0xf]
    %v1566 = vld [vmem:[#allocation6 + $0x10] sm:$0xf]
    %v1567 = vld [vmem:[#allocation6 + $0x14] sm:$0xf]
    %v1568 = vld [vmem:[#allocation6 + $0x18] sm:$0xf]
    %v1569 = vld [vmem:[#allocation6 + $0x1c] sm:$0xf]
    %v1570 = vld [vmem:[#allocation6 + $0x20] sm:$0xf]
    %v1571 = vld [vmem:[#allocation6 + $0x24] sm:$0xf]
    %v1572 = vld [vmem:[#allocation6 + $0x28] sm:$0xf]
    %v1573 = vld [vmem:[#allocation6 + $0x2c] sm:$0xf]
    %v1574 = vld [vmem:[#allocation6 + $0x30] sm:$0xf]
    %v1575 = vld [vmem:[#allocation6 + $0x34] sm:$0xf]
    %v1576 = vld [vmem:[#allocation6 + $0x38] sm:$0xf]
    %v1577 = vld [vmem:[#allocation6 + $0x3c] sm:$0xf]
    %v1594 = vunpack.c.l.b16 %v1562
    %v1595 = vunpack.c.l.b16 %v1563
    %v1596 = vunpack.c.l.b16 %v1564
    %v1597 = vunpack.c.l.b16 %v1565
    %v1598 = vunpack.c.l.b16 %v1566
    %v1599 = vunpack.c.l.b16 %v1567
    %v1600 = vunpack.c.l.b16 %v1568
    %v1601 = vunpack.c.l.b16 %v1569
    %v1602 = vunpack.c.l.b16 %v1570
    %v1603 = vunpack.c.l.b16 %v1571
    %v1604 = vunpack.c.l.b16 %v1572
    %v1605 = vunpack.c.l.b16 %v1573
    %v1606 = vunpack.c.l.b16 %v1574
    %v1607 = vunpack.c.l.b16 %v1575
    %v1608 = vunpack.c.l.b16 %v1576
    %v1609 = vunpack.c.l.b16 %v1577
    %v1610 = vpack.c.b16 %v1595, %v1594
    %v1611 = vpack.c.b16 %v1597, %v1596
    %v1612 = vpack.c.b16 %v1599, %v1598
    %v1613 = vpack.c.b16 %v1601, %v1600
    %v1614 = vpack.c.b16 %v1603, %v1602
    %v1615 = vpack.c.b16 %v1605, %v1604
    %v1616 = vpack.c.b16 %v1607, %v1606
    %v1617 = vpack.c.b16 %v1609, %v1608
    %1626 = vmatpush.bf16.msra.mxu0 %v1617
    %1627 = vmatpush.bf16.msra.mxu0 %v1616
    %1628 = vmatpush.bf16.msra.mxu0 %v1615
    %1629 = vmatpush.bf16.msra.mxu0 %v1614
    %1630 = vmatpush.bf16.msra.mxu0 %v1613
    %1631 = vmatpush.bf16.msra.mxu0 %v1612
    %1632 = vmatpush.bf16.msra.mxu0 %v1611
    %1633 = vmatpush.bf16.msra.mxu0 %v1610
    %1634 = vmatmul.bf16.gmra.mxu0 %v1561
    %v1635 = vpop.f32.mrf.mxu0
    %v1636 = vadd.f32 0.0, %v1635
    %v1637 = vpop.f32.mrf.mxu0
    %1638 = vdwg.mxu0
    %v1639 = vadd.f32 %v1459, %v1636
    %v1640 = vtanh.pop %v1639
    %1642 = vset.pattern.permute.xlu0 0
    %1643 = vperm.xlu0 %1642, %v1461
    %v1644 = vpop.permute.xlu0 %1643
    %v1646 = vmul.f32 %v1644, %v1640
    %v1647 = vsub.f32 1.0, %v1461
    %1649 = vset.pattern.permute.xlu0 0
    %1650 = vperm.xlu0 %1649, %v1647
    %v1651 = vpop.permute.xlu0 %1650
    %v1653 = vmul.f32 %v1651, %v1454
    %v1654 = vadd.f32 %v1646, %v1653
    %s1655 = scalar_lea.vmem [#allocation8], 56
    %1656 = vst [vmem:[%s1655] sm:$0xff] %v1654
    %1657 = vst [vmem:[#allocation2] sm:$0xff] %v1654
    // Predicated region
    $region34: #{tpu_custom_call.1} parent=1 // pred_check
      _
    $region35: #{tpu_custom_call.1} parent=1 // pred_check_branch
      %1659 = sbr.rel (0) target = $region37
    $region36: #{tpu_custom_call.1} parent=1 // pred_region
      %1661 = vsyncadd [#allocation5], 0
      %s1662 = sshll.u32 [#allocation8], 4
      %s1663 = int_to_ptr.vmem [resolvable:$true] %s1662
      %s1664 = sshll.u32 %s5, 4
      %s1665 = int_to_ptr.hbm [resolvable:$true] %s1664
      %1670 = dma.vmem_to_hbm [thread:$0]  %s1663, 1024, %s1665, [#allocation5], 128, 128, 8
    $region37: #{tpu_custom_call.1} parent=1 // pred_fallthru
      _
    // Predicated region
    $region38: #{tpu_custom_call.1} parent=1 // pred_check
      _
    $region39: #{tpu_custom_call.1} parent=1 // pred_check_branch
      %1672 = sbr.rel (0) target = $region41
    $region40: #{tpu_custom_call.1} parent=1 // pred_region
      %1674 = dma.done [#allocation5], 1024
    $region41: #{tpu_custom_call.1} parent=1 // pred_fallthru
      _
    %1675 = vsyncpa [#allocation4], 1
    %1676 = vsyncpa [#allocation7], 1
    %1677 = vsyncpa [#allocation5], 1

</llo_original>
